<compile_context>
chip_gen: v6e
topology: v6e:2x2x1
jax: 0.10.0
libtpu: 0.0.40
codegen_flags: <defaults>
</compile_context>

<pallas_src>
import jax
import jax.numpy as jnp
from jax import lax
from jax.experimental import pallas as pl
from jax.experimental.pallas import tpu as pltpu

OBS_LEN = 8      # observation_len
PRED_LEN = 12    # prediction_len
BATCH = 8
EMB_DIM = 16     # spatial embedding dim inside RNNEncoder
HID_DIM = 32     # encoder_cfg['rnn']['hidden_dim']
NOISE_DIM = 8    # mlp_decoder_ctx_cfg['noise_dim']
CTX_DIM = HID_DIM - NOISE_DIM
MLP_DIM = 32     # hidden width of the ff decoder


# ---------------------------------------------------------------------------
# Fused kernel: RNNEncoder (spatial emb + LSTM) + add_noise + ff MLPDecoder
# ---------------------------------------------------------------------------
def _generator_kernel(x_ref, noise_ref, w_emb_ref, b_emb_ref, w_ih_ref,
                      w_hh_ref, b_g_ref, w_ctx_ref, b_ctx_ref,
                      w1c_ref, w1n_ref, b1_ref, w2_ref, b2_ref, out_ref):
    """x_ref: (obs_len*bs, 2) time-major-flattened -> out_ref: (bs, pred_len*2)."""
    bs = out_ref.shape[0]
    obs_len = x_ref.shape[0] // bs
    hid = w_hh_ref.shape[0]

    # ---- hoisted: spatial embedding + input-to-hidden projection, all steps --
    x_all = x_ref[...]                                              # (obs_len*bs, 2)
    emb_all = jnp.maximum(
        jnp.dot(x_all, w_emb_ref[...], preferred_element_type=jnp.float32)
        + b_emb_ref[...], 0.0)                                      # (obs_len*bs, emb)
    xg_all = (jnp.dot(emb_all, w_ih_ref[...], preferred_element_type=jnp.float32)
              + b_g_ref[...])                                       # (obs_len*bs, 4*hid)

    # ---- LSTM recurrence, fully unrolled (obs_len is a static constant) ------
    w_hh = w_hh_ref[...]                                            # (hid, 4*hid)
    h = jnp.zeros((bs, hid), jnp.float32)
    c = jnp.zeros((bs, hid), jnp.float32)
    for t in range(obs_len):                                        # static unroll
        # sublane-aligned static slice (t*bs multiple of 8) of precomputed gates
        gates = xg_all[t * bs:(t + 1) * bs, :] + jnp.dot(
            h, w_hh, preferred_element_type=jnp.float32)            # (bs, 4*hid)
        # one sigmoid + one tanh over the full 128-lane gate vreg; gate
        # extraction is static lane slicing (i, f, g, o in PyTorch order).
        sig = jax.nn.sigmoid(gates)
        tnh = jnp.tanh(gates)
        i_g = sig[:, 0 * hid:1 * hid]
        f_g = sig[:, 1 * hid:2 * hid]
        g_g = tnh[:, 2 * hid:3 * hid]
        o_g = sig[:, 3 * hid:4 * hid]
        c = f_g * c + i_g * g_g
        h = o_g * jnp.tanh(c)

    # ---- mlp_decoder_context (Linear + ReLU; dropout identity in eval) -------
    ctx = jnp.maximum(
        jnp.dot(h, w_ctx_ref[...], preferred_element_type=jnp.float32)
        + b_ctx_ref[...], 0.0)                                      # (bs, ctx_dim)

    # ---- noise folded into the first decoder bias ----------------------------
    # concat([ctx, noise_bcast]) @ w1  ==  ctx @ w1[:ctx_dim] + noise @ w1[ctx_dim:]
    b1_eff = b1_ref[...] + jnp.dot(
        noise_ref[...], w1n_ref[...], preferred_element_type=jnp.float32)  # (1, mlp)

    # ---- ff decoder: Linear + ReLU -> Linear ----------------------------------
    hdn = jnp.maximum(
        jnp.dot(ctx, w1c_ref[...], preferred_element_type=jnp.float32)
        + b1_eff, 0.0)                                              # (bs, mlp)
    out_ref[...] = (jnp.dot(hdn, w2_ref[...], preferred_element_type=jnp.float32)
                    + b2_ref[...])                                  # (bs, pred_len*2)


# ---------------------------------------------------------------------------
# Wrapper
# ---------------------------------------------------------------------------
def generator_forward(x_obs, noise, params):
    """x_obs: (obs_len, bs, 2) time-major, noise: (1, noise_dim) -> (bs, pred_len, 2)."""
    obs_len, bs, _ = x_obs.shape
    # flatten time-major trajectory into one slab (row t*bs + b)
    x_flat = x_obs.reshape(obs_len * bs, 2)
    # pre-split w1 so the kernel never slices sublanes at a non-8-aligned boundary
    w1c = params["w1"][:CTX_DIM, :]   # rows multiplying ctx   (concat order: ctx first)
    w1n = params["w1"][CTX_DIM:, :]   # rows multiplying noise (concat order: noise last)

    vmem_spec = pl.BlockSpec(memory_space=pltpu.MemorySpace.VMEM)
    out = pl.pallas_call(
        _generator_kernel,
        out_shape=jax.ShapeDtypeStruct((bs, PRED_LEN * 2), jnp.float32),
        in_specs=[vmem_spec] * 14,
        out_specs=vmem_spec,
    )(x_flat, noise, params["w_emb"], params["b_emb"], params["w_ih"],
      params["w_hh"], params["b_g"], params["w_ctx"], params["b_ctx"],
      w1c, w1n, params["b1"], params["w2"], params["b2"])
    # predictions.view(B, -1, 2)
    return out.reshape(bs, PRED_LEN, 2)


# ---------------------------------------------------------------------------
# Pure-JAX reference (mirrors the PyTorch forward) for correctness checking
# ---------------------------------------------------------------------------
def generator_reference(x_obs, noise, params):
    obs_len, bs, _ = x_obs.shape
    hid = HID_DIM
    emb = jax.nn.relu(
        x_obs.reshape(-1, 2) @ params["w_emb"] + params["b_emb"]
    ).reshape(obs_len, bs, EMB_DIM)

    def step(carry, xt):
        h, c = carry
        gates = xt @ params["w_ih"] + h @ params["w_hh"] + params["b_g"]
        i = jax.nn.sigmoid(gates[:, :hid])
        f = jax.nn.sigmoid(gates[:, hid:2 * hid])
        g = jnp.tanh(gates[:, 2 * hid:3 * hid])
        o = jax.nn.sigmoid(gates[:, 3 * hid:])
        c = f * c + i * g
        h = o * jnp.tanh(c)
        return (h, c), None

    init = (jnp.zeros((bs, hid), jnp.float32), jnp.zeros((bs, hid), jnp.float32))
    (h, _), _ = lax.scan(step, init, emb)
    ctx = jax.nn.relu(h @ params["w_ctx"] + params["b_ctx"])
    new_h = jnp.concatenate(
        [ctx, jnp.broadcast_to(noise, (bs, NOISE_DIM))], axis=-1)
    hdn = jax.nn.relu(new_h @ params["w1"] + params["b1"])
    out = hdn @ params["w2"] + params["b2"]
    return out.reshape(bs, PRED_LEN, 2)


def init_params(seed=42):
    k = jax.random.PRNGKey(seed)
    ks = jax.random.split(k, 8)
    s = 0.1
    return {
        # RNNEncoder
        "w_emb": s * jax.random.normal(ks[0], (2, EMB_DIM), jnp.float32),
        "b_emb": jnp.zeros((1, EMB_DIM), jnp.float32),
        "w_ih": s * jax.random.normal(ks[1], (EMB_DIM, 4 * HID_DIM), jnp.float32),
        "w_hh": s * jax.random.normal(ks[2], (HID_DIM, 4 * HID_DIM), jnp.float32),
        "b_g": jnp.zeros((1, 4 * HID_DIM), jnp.float32),
        # mlp_decoder_context: hid -> hid - noise_dim
        "w_ctx": s * jax.random.normal(ks[3], (HID_DIM, CTX_DIM), jnp.float32),
        "b_ctx": jnp.zeros((1, CTX_DIM), jnp.float32),
        # ff MLPDecoder: hid -> mlp -> pred_len*2
        "w1": s * jax.random.normal(ks[4], (HID_DIM, MLP_DIM), jnp.float32),
        "b1": jnp.zeros((1, MLP_DIM), jnp.float32),
        "w2": s * jax.random.normal(ks[5], (MLP_DIM, PRED_LEN * 2), jnp.float32),
        "b2": jnp.zeros((1, PRED_LEN * 2), jnp.float32),
    }


if __name__ == "__main__":
    key = jax.random.PRNGKey(0)
    kx, kn = jax.random.split(key)
    # observed trajectory, time-major: (obs_len, batch, 2)
    x_obs = jax.random.normal(kx, (OBS_LEN, BATCH, 2), jnp.float32)
    # gaussian noise (temp_len=1, noise_dim), deterministic here (get_noise analogue)
    noise = jax.random.normal(kn, (1, NOISE_DIM), jnp.float32)

    params = init_params()
    preds = jax.jit(generator_forward)(x_obs, noise, params)
    preds = jax.block_until_ready(preds)

    assert preds.shape == (BATCH, PRED_LEN, 2), preds.shape
    assert bool(jnp.all(jnp.isfinite(preds)))

    ref = generator_reference(x_obs, noise, params)
    assert bool(jnp.allclose(preds, ref, rtol=1e-4, atol=1e-5)), \
        float(jnp.max(jnp.abs(preds - ref)))

    # TODO(synk): autoregressive RNNDecoder variant (decoder_type='rnn') and
    # visual-feature / condition inputs are not implemented; 'ff' decoder path chosen.
    print("KERNEL_OK")
</pallas_src>

<mosaic_0001>
module attributes {stable_mosaic.version = 11 : i64} {
  func.func @_generator_kernel(%arg0: memref<64x2xf32, #tpu.memory_space<vmem>>, %arg1: memref<1x8xf32, #tpu.memory_space<vmem>>, %arg2: memref<2x16xf32, #tpu.memory_space<vmem>>, %arg3: memref<1x16xf32, #tpu.memory_space<vmem>>, %arg4: memref<16x128xf32, #tpu.memory_space<vmem>>, %arg5: memref<32x128xf32, #tpu.memory_space<vmem>>, %arg6: memref<1x128xf32, #tpu.memory_space<vmem>>, %arg7: memref<32x24xf32, #tpu.memory_space<vmem>>, %arg8: memref<1x24xf32, #tpu.memory_space<vmem>>, %arg9: memref<24x32xf32, #tpu.memory_space<vmem>>, %arg10: memref<8x32xf32, #tpu.memory_space<vmem>>, %arg11: memref<1x32xf32, #tpu.memory_space<vmem>>, %arg12: memref<32x24xf32, #tpu.memory_space<vmem>>, %arg13: memref<1x24xf32, #tpu.memory_space<vmem>>, %arg14: memref<8x24xf32, #tpu.memory_space<vmem>>) attributes {dimension_semantics = [], scalar_prefetch = 0 : i64, scratch_operands = 0 : i64, tpu.core_type = #tpu.core_type<tc>} {
    %c0 = arith.constant 0 : index
    %c0_0 = arith.constant 0 : index
    %0 = vector.load %arg0[%c0, %c0_0] : memref<64x2xf32, #tpu.memory_space<vmem>>, vector<64x2xf32>
    %c0_1 = arith.constant 0 : index
    %c0_2 = arith.constant 0 : index
    %1 = vector.load %arg2[%c0_1, %c0_2] : memref<2x16xf32, #tpu.memory_space<vmem>>, vector<2x16xf32>
    %cst = arith.constant dense<0.000000e+00> : vector<64x16xf32>
    %2 = tpu.matmul %0, %1, %cst {dimension_numbers = #tpu.dot_dimension_numbers<[1], [0], [0], [1], [0, 0, 1, 1], [], []>} : vector<64x2xf32>, vector<2x16xf32>, vector<64x16xf32> -> vector<64x16xf32>
    %c0_3 = arith.constant 0 : index
    %c0_4 = arith.constant 0 : index
    %3 = vector.load %arg3[%c0_3, %c0_4] : memref<1x16xf32, #tpu.memory_space<vmem>>, vector<1x16xf32>
    %4 = vector.broadcast %3 : vector<1x16xf32> to vector<64x16xf32>
    %5 = arith.addf %2, %4 : vector<64x16xf32>
    %cst_5 = arith.constant 0.000000e+00 : f32
    %6 = vector.broadcast %cst_5 : f32 to vector<64x16xf32>
    %7 = arith.maximumf %5, %6 : vector<64x16xf32>
    %c0_6 = arith.constant 0 : index
    %c0_7 = arith.constant 0 : index
    %8 = vector.load %arg4[%c0_6, %c0_7] : memref<16x128xf32, #tpu.memory_space<vmem>>, vector<16x128xf32>
    %cst_8 = arith.constant dense<0.000000e+00> : vector<64x128xf32>
    %9 = tpu.matmul %7, %8, %cst_8 {dimension_numbers = #tpu.dot_dimension_numbers<[1], [0], [0], [1], [0, 0, 1, 1], [], []>} : vector<64x16xf32>, vector<16x128xf32>, vector<64x128xf32> -> vector<64x128xf32>
    %c0_9 = arith.constant 0 : index
    %c0_10 = arith.constant 0 : index
    %10 = vector.load %arg6[%c0_9, %c0_10] : memref<1x128xf32, #tpu.memory_space<vmem>>, vector<1x128xf32>
    %11 = vector.broadcast %10 : vector<1x128xf32> to vector<64x128xf32>
    %12 = arith.addf %9, %11 : vector<64x128xf32>
    %c0_11 = arith.constant 0 : index
    %c0_12 = arith.constant 0 : index
    %13 = vector.load %arg5[%c0_11, %c0_12] : memref<32x128xf32, #tpu.memory_space<vmem>>, vector<32x128xf32>
    %cst_13 = arith.constant 0.000000e+00 : f32
    %14 = vector.broadcast %cst_13 : f32 to vector<8x32xf32>
    %cst_14 = arith.constant 0.000000e+00 : f32
    %15 = vector.broadcast %cst_14 : f32 to vector<8x32xf32>
    %16 = vector.extract_strided_slice %12 {offsets = [0, 0], sizes = [8, 128], strides = [1, 1]} : vector<64x128xf32> to vector<8x128xf32>
    %cst_15 = arith.constant dense<0.000000e+00> : vector<8x128xf32>
    %17 = tpu.matmul %14, %13, %cst_15 {dimension_numbers = #tpu.dot_dimension_numbers<[1], [0], [0], [1], [0, 0, 1, 1], [], []>} : vector<8x32xf32>, vector<32x128xf32>, vector<8x128xf32> -> vector<8x128xf32>
    %18 = arith.addf %16, %17 : vector<8x128xf32>
    %19 = arith.negf %18 : vector<8x128xf32>
    %20 = math.exp %19 : vector<8x128xf32>
    %cst_16 = arith.constant 1.000000e+00 : f32
    %21 = vector.broadcast %cst_16 : f32 to vector<8x128xf32>
    %22 = arith.addf %21, %20 : vector<8x128xf32>
    %23 = arith.divf %21, %22 : vector<8x128xf32>
    %24 = math.tanh %18 : vector<8x128xf32>
    %25 = vector.extract_strided_slice %23 {offsets = [0, 0], sizes = [8, 32], strides = [1, 1]} : vector<8x128xf32> to vector<8x32xf32>
    %26 = vector.extract_strided_slice %23 {offsets = [0, 32], sizes = [8, 32], strides = [1, 1]} : vector<8x128xf32> to vector<8x32xf32>
    %27 = vector.extract_strided_slice %24 {offsets = [0, 64], sizes = [8, 32], strides = [1, 1]} : vector<8x128xf32> to vector<8x32xf32>
    %28 = vector.extract_strided_slice %23 {offsets = [0, 96], sizes = [8, 32], strides = [1, 1]} : vector<8x128xf32> to vector<8x32xf32>
    %29 = arith.mulf %26, %15 : vector<8x32xf32>
    %30 = arith.mulf %25, %27 : vector<8x32xf32>
    %31 = arith.addf %29, %30 : vector<8x32xf32>
    %32 = math.tanh %31 : vector<8x32xf32>
    %33 = arith.mulf %28, %32 : vector<8x32xf32>
    %34 = vector.extract_strided_slice %12 {offsets = [8, 0], sizes = [8, 128], strides = [1, 1]} : vector<64x128xf32> to vector<8x128xf32>
    %cst_17 = arith.constant dense<0.000000e+00> : vector<8x128xf32>
    %35 = tpu.matmul %33, %13, %cst_17 {dimension_numbers = #tpu.dot_dimension_numbers<[1], [0], [0], [1], [0, 0, 1, 1], [], []>} : vector<8x32xf32>, vector<32x128xf32>, vector<8x128xf32> -> vector<8x128xf32>
    %36 = arith.addf %34, %35 : vector<8x128xf32>
    %37 = arith.negf %36 : vector<8x128xf32>
    %38 = math.exp %37 : vector<8x128xf32>
    %cst_18 = arith.constant 1.000000e+00 : f32
    %39 = vector.broadcast %cst_18 : f32 to vector<8x128xf32>
    %40 = arith.addf %39, %38 : vector<8x128xf32>
    %41 = arith.divf %39, %40 : vector<8x128xf32>
    %42 = math.tanh %36 : vector<8x128xf32>
    %43 = vector.extract_strided_slice %41 {offsets = [0, 0], sizes = [8, 32], strides = [1, 1]} : vector<8x128xf32> to vector<8x32xf32>
    %44 = vector.extract_strided_slice %41 {offsets = [0, 32], sizes = [8, 32], strides = [1, 1]} : vector<8x128xf32> to vector<8x32xf32>
    %45 = vector.extract_strided_slice %42 {offsets = [0, 64], sizes = [8, 32], strides = [1, 1]} : vector<8x128xf32> to vector<8x32xf32>
    %46 = vector.extract_strided_slice %41 {offsets = [0, 96], sizes = [8, 32], strides = [1, 1]} : vector<8x128xf32> to vector<8x32xf32>
    %47 = arith.mulf %44, %31 : vector<8x32xf32>
    %48 = arith.mulf %43, %45 : vector<8x32xf32>
    %49 = arith.addf %47, %48 : vector<8x32xf32>
    %50 = math.tanh %49 : vector<8x32xf32>
    %51 = arith.mulf %46, %50 : vector<8x32xf32>
    %52 = vector.extract_strided_slice %12 {offsets = [16, 0], sizes = [8, 128], strides = [1, 1]} : vector<64x128xf32> to vector<8x128xf32>
    %cst_19 = arith.constant dense<0.000000e+00> : vector<8x128xf32>
    %53 = tpu.matmul %51, %13, %cst_19 {dimension_numbers = #tpu.dot_dimension_numbers<[1], [0], [0], [1], [0, 0, 1, 1], [], []>} : vector<8x32xf32>, vector<32x128xf32>, vector<8x128xf32> -> vector<8x128xf32>
    %54 = arith.addf %52, %53 : vector<8x128xf32>
    %55 = arith.negf %54 : vector<8x128xf32>
    %56 = math.exp %55 : vector<8x128xf32>
    %cst_20 = arith.constant 1.000000e+00 : f32
    %57 = vector.broadcast %cst_20 : f32 to vector<8x128xf32>
    %58 = arith.addf %57, %56 : vector<8x128xf32>
    %59 = arith.divf %57, %58 : vector<8x128xf32>
    %60 = math.tanh %54 : vector<8x128xf32>
    %61 = vector.extract_strided_slice %59 {offsets = [0, 0], sizes = [8, 32], strides = [1, 1]} : vector<8x128xf32> to vector<8x32xf32>
    %62 = vector.extract_strided_slice %59 {offsets = [0, 32], sizes = [8, 32], strides = [1, 1]} : vector<8x128xf32> to vector<8x32xf32>
    %63 = vector.extract_strided_slice %60 {offsets = [0, 64], sizes = [8, 32], strides = [1, 1]} : vector<8x128xf32> to vector<8x32xf32>
    %64 = vector.extract_strided_slice %59 {offsets = [0, 96], sizes = [8, 32], strides = [1, 1]} : vector<8x128xf32> to vector<8x32xf32>
    %65 = arith.mulf %62, %49 : vector<8x32xf32>
    %66 = arith.mulf %61, %63 : vector<8x32xf32>
    %67 = arith.addf %65, %66 : vector<8x32xf32>
    %68 = math.tanh %67 : vector<8x32xf32>
    %69 = arith.mulf %64, %68 : vector<8x32xf32>
    %70 = vector.extract_strided_slice %12 {offsets = [24, 0], sizes = [8, 128], strides = [1, 1]} : vector<64x128xf32> to vector<8x128xf32>
    %cst_21 = arith.constant dense<0.000000e+00> : vector<8x128xf32>
    %71 = tpu.matmul %69, %13, %cst_21 {dimension_numbers = #tpu.dot_dimension_numbers<[1], [0], [0], [1], [0, 0, 1, 1], [], []>} : vector<8x32xf32>, vector<32x128xf32>, vector<8x128xf32> -> vector<8x128xf32>
    %72 = arith.addf %70, %71 : vector<8x128xf32>
    %73 = arith.negf %72 : vector<8x128xf32>
    %74 = math.exp %73 : vector<8x128xf32>
    %cst_22 = arith.constant 1.000000e+00 : f32
    %75 = vector.broadcast %cst_22 : f32 to vector<8x128xf32>
    %76 = arith.addf %75, %74 : vector<8x128xf32>
    %77 = arith.divf %75, %76 : vector<8x128xf32>
    %78 = math.tanh %72 : vector<8x128xf32>
    %79 = vector.extract_strided_slice %77 {offsets = [0, 0], sizes = [8, 32], strides = [1, 1]} : vector<8x128xf32> to vector<8x32xf32>
    %80 = vector.extract_strided_slice %77 {offsets = [0, 32], sizes = [8, 32], strides = [1, 1]} : vector<8x128xf32> to vector<8x32xf32>
    %81 = vector.extract_strided_slice %78 {offsets = [0, 64], sizes = [8, 32], strides = [1, 1]} : vector<8x128xf32> to vector<8x32xf32>
    %82 = vector.extract_strided_slice %77 {offsets = [0, 96], sizes = [8, 32], strides = [1, 1]} : vector<8x128xf32> to vector<8x32xf32>
    %83 = arith.mulf %80, %67 : vector<8x32xf32>
    %84 = arith.mulf %79, %81 : vector<8x32xf32>
    %85 = arith.addf %83, %84 : vector<8x32xf32>
    %86 = math.tanh %85 : vector<8x32xf32>
    %87 = arith.mulf %82, %86 : vector<8x32xf32>
    %88 = vector.extract_strided_slice %12 {offsets = [32, 0], sizes = [8, 128], strides = [1, 1]} : vector<64x128xf32> to vector<8x128xf32>
    %cst_23 = arith.constant dense<0.000000e+00> : vector<8x128xf32>
    %89 = tpu.matmul %87, %13, %cst_23 {dimension_numbers = #tpu.dot_dimension_numbers<[1], [0], [0], [1], [0, 0, 1, 1], [], []>} : vector<8x32xf32>, vector<32x128xf32>, vector<8x128xf32> -> vector<8x128xf32>
    %90 = arith.addf %88, %89 : vector<8x128xf32>
    %91 = arith.negf %90 : vector<8x128xf32>
    %92 = math.exp %91 : vector<8x128xf32>
    %cst_24 = arith.constant 1.000000e+00 : f32
    %93 = vector.broadcast %cst_24 : f32 to vector<8x128xf32>
    %94 = arith.addf %93, %92 : vector<8x128xf32>
    %95 = arith.divf %93, %94 : vector<8x128xf32>
    %96 = math.tanh %90 : vector<8x128xf32>
    %97 = vector.extract_strided_slice %95 {offsets = [0, 0], sizes = [8, 32], strides = [1, 1]} : vector<8x128xf32> to vector<8x32xf32>
    %98 = vector.extract_strided_slice %95 {offsets = [0, 32], sizes = [8, 32], strides = [1, 1]} : vector<8x128xf32> to vector<8x32xf32>
    %99 = vector.extract_strided_slice %96 {offsets = [0, 64], sizes = [8, 32], strides = [1, 1]} : vector<8x128xf32> to vector<8x32xf32>
    %100 = vector.extract_strided_slice %95 {offsets = [0, 96], sizes = [8, 32], strides = [1, 1]} : vector<8x128xf32> to vector<8x32xf32>
    %101 = arith.mulf %98, %85 : vector<8x32xf32>
    %102 = arith.mulf %97, %99 : vector<8x32xf32>
    %103 = arith.addf %101, %102 : vector<8x32xf32>
    %104 = math.tanh %103 : vector<8x32xf32>
    %105 = arith.mulf %100, %104 : vector<8x32xf32>
    %106 = vector.extract_strided_slice %12 {offsets = [40, 0], sizes = [8, 128], strides = [1, 1]} : vector<64x128xf32> to vector<8x128xf32>
    %cst_25 = arith.constant dense<0.000000e+00> : vector<8x128xf32>
    %107 = tpu.matmul %105, %13, %cst_25 {dimension_numbers = #tpu.dot_dimension_numbers<[1], [0], [0], [1], [0, 0, 1, 1], [], []>} : vector<8x32xf32>, vector<32x128xf32>, vector<8x128xf32> -> vector<8x128xf32>
    %108 = arith.addf %106, %107 : vector<8x128xf32>
    %109 = arith.negf %108 : vector<8x128xf32>
    %110 = math.exp %109 : vector<8x128xf32>
    %cst_26 = arith.constant 1.000000e+00 : f32
    %111 = vector.broadcast %cst_26 : f32 to vector<8x128xf32>
    %112 = arith.addf %111, %110 : vector<8x128xf32>
    %113 = arith.divf %111, %112 : vector<8x128xf32>
    %114 = math.tanh %108 : vector<8x128xf32>
    %115 = vector.extract_strided_slice %113 {offsets = [0, 0], sizes = [8, 32], strides = [1, 1]} : vector<8x128xf32> to vector<8x32xf32>
    %116 = vector.extract_strided_slice %113 {offsets = [0, 32], sizes = [8, 32], strides = [1, 1]} : vector<8x128xf32> to vector<8x32xf32>
    %117 = vector.extract_strided_slice %114 {offsets = [0, 64], sizes = [8, 32], strides = [1, 1]} : vector<8x128xf32> to vector<8x32xf32>
    %118 = vector.extract_strided_slice %113 {offsets = [0, 96], sizes = [8, 32], strides = [1, 1]} : vector<8x128xf32> to vector<8x32xf32>
    %119 = arith.mulf %116, %103 : vector<8x32xf32>
    %120 = arith.mulf %115, %117 : vector<8x32xf32>
    %121 = arith.addf %119, %120 : vector<8x32xf32>
    %122 = math.tanh %121 : vector<8x32xf32>
    %123 = arith.mulf %118, %122 : vector<8x32xf32>
    %124 = vector.extract_strided_slice %12 {offsets = [48, 0], sizes = [8, 128], strides = [1, 1]} : vector<64x128xf32> to vector<8x128xf32>
    %cst_27 = arith.constant dense<0.000000e+00> : vector<8x128xf32>
    %125 = tpu.matmul %123, %13, %cst_27 {dimension_numbers = #tpu.dot_dimension_numbers<[1], [0], [0], [1], [0, 0, 1, 1], [], []>} : vector<8x32xf32>, vector<32x128xf32>, vector<8x128xf32> -> vector<8x128xf32>
    %126 = arith.addf %124, %125 : vector<8x128xf32>
    %127 = arith.negf %126 : vector<8x128xf32>
    %128 = math.exp %127 : vector<8x128xf32>
    %cst_28 = arith.constant 1.000000e+00 : f32
    %129 = vector.broadcast %cst_28 : f32 to vector<8x128xf32>
    %130 = arith.addf %129, %128 : vector<8x128xf32>
    %131 = arith.divf %129, %130 : vector<8x128xf32>
    %132 = math.tanh %126 : vector<8x128xf32>
    %133 = vector.extract_strided_slice %131 {offsets = [0, 0], sizes = [8, 32], strides = [1, 1]} : vector<8x128xf32> to vector<8x32xf32>
    %134 = vector.extract_strided_slice %131 {offsets = [0, 32], sizes = [8, 32], strides = [1, 1]} : vector<8x128xf32> to vector<8x32xf32>
    %135 = vector.extract_strided_slice %132 {offsets = [0, 64], sizes = [8, 32], strides = [1, 1]} : vector<8x128xf32> to vector<8x32xf32>
    %136 = vector.extract_strided_slice %131 {offsets = [0, 96], sizes = [8, 32], strides = [1, 1]} : vector<8x128xf32> to vector<8x32xf32>
    %137 = arith.mulf %134, %121 : vector<8x32xf32>
    %138 = arith.mulf %133, %135 : vector<8x32xf32>
    %139 = arith.addf %137, %138 : vector<8x32xf32>
    %140 = math.tanh %139 : vector<8x32xf32>
    %141 = arith.mulf %136, %140 : vector<8x32xf32>
    %142 = vector.extract_strided_slice %12 {offsets = [56, 0], sizes = [8, 128], strides = [1, 1]} : vector<64x128xf32> to vector<8x128xf32>
    %cst_29 = arith.constant dense<0.000000e+00> : vector<8x128xf32>
    %143 = tpu.matmul %141, %13, %cst_29 {dimension_numbers = #tpu.dot_dimension_numbers<[1], [0], [0], [1], [0, 0, 1, 1], [], []>} : vector<8x32xf32>, vector<32x128xf32>, vector<8x128xf32> -> vector<8x128xf32>
    %144 = arith.addf %142, %143 : vector<8x128xf32>
    %145 = arith.negf %144 : vector<8x128xf32>
    %146 = math.exp %145 : vector<8x128xf32>
    %cst_30 = arith.constant 1.000000e+00 : f32
    %147 = vector.broadcast %cst_30 : f32 to vector<8x128xf32>
    %148 = arith.addf %147, %146 : vector<8x128xf32>
    %149 = arith.divf %147, %148 : vector<8x128xf32>
    %150 = math.tanh %144 : vector<8x128xf32>
    %151 = vector.extract_strided_slice %149 {offsets = [0, 0], sizes = [8, 32], strides = [1, 1]} : vector<8x128xf32> to vector<8x32xf32>
    %152 = vector.extract_strided_slice %149 {offsets = [0, 32], sizes = [8, 32], strides = [1, 1]} : vector<8x128xf32> to vector<8x32xf32>
    %153 = vector.extract_strided_slice %150 {offsets = [0, 64], sizes = [8, 32], strides = [1, 1]} : vector<8x128xf32> to vector<8x32xf32>
    %154 = vector.extract_strided_slice %149 {offsets = [0, 96], sizes = [8, 32], strides = [1, 1]} : vector<8x128xf32> to vector<8x32xf32>
    %155 = arith.mulf %152, %139 : vector<8x32xf32>
    %156 = arith.mulf %151, %153 : vector<8x32xf32>
    %157 = arith.addf %155, %156 : vector<8x32xf32>
    %158 = math.tanh %157 : vector<8x32xf32>
    %159 = arith.mulf %154, %158 : vector<8x32xf32>
    %c0_31 = arith.constant 0 : index
    %c0_32 = arith.constant 0 : index
    %160 = vector.load %arg7[%c0_31, %c0_32] : memref<32x24xf32, #tpu.memory_space<vmem>>, vector<32x24xf32>
    %cst_33 = arith.constant dense<0.000000e+00> : vector<8x24xf32>
    %161 = tpu.matmul %159, %160, %cst_33 {dimension_numbers = #tpu.dot_dimension_numbers<[1], [0], [0], [1], [0, 0, 1, 1], [], []>} : vector<8x32xf32>, vector<32x24xf32>, vector<8x24xf32> -> vector<8x24xf32>
    %c0_34 = arith.constant 0 : index
    %c0_35 = arith.constant 0 : index
    %162 = vector.load %arg8[%c0_34, %c0_35] : memref<1x24xf32, #tpu.memory_space<vmem>>, vector<1x24xf32>
    %163 = vector.broadcast %162 : vector<1x24xf32> to vector<8x24xf32>
    %164 = arith.addf %161, %163 : vector<8x24xf32>
    %cst_36 = arith.constant 0.000000e+00 : f32
    %165 = vector.broadcast %cst_36 : f32 to vector<8x24xf32>
    %166 = arith.maximumf %164, %165 : vector<8x24xf32>
    %c0_37 = arith.constant 0 : index
    %c0_38 = arith.constant 0 : index
    %167 = vector.load %arg11[%c0_37, %c0_38] : memref<1x32xf32, #tpu.memory_space<vmem>>, vector<1x32xf32>
    %c0_39 = arith.constant 0 : index
    %c0_40 = arith.constant 0 : index
    %168 = vector.load %arg1[%c0_39, %c0_40] : memref<1x8xf32, #tpu.memory_space<vmem>>, vector<1x8xf32>
    %c0_41 = arith.constant 0 : index
    %c0_42 = arith.constant 0 : index
    %169 = vector.load %arg10[%c0_41, %c0_42] : memref<8x32xf32, #tpu.memory_space<vmem>>, vector<8x32xf32>
    %cst_43 = arith.constant dense<0.000000e+00> : vector<1x32xf32>
    %170 = tpu.matmul %168, %169, %cst_43 {dimension_numbers = #tpu.dot_dimension_numbers<[1], [0], [0], [1], [0, 0, 1, 1], [], []>} : vector<1x8xf32>, vector<8x32xf32>, vector<1x32xf32> -> vector<1x32xf32>
    %171 = arith.addf %167, %170 : vector<1x32xf32>
    %c0_44 = arith.constant 0 : index
    %c0_45 = arith.constant 0 : index
    %172 = vector.load %arg9[%c0_44, %c0_45] : memref<24x32xf32, #tpu.memory_space<vmem>>, vector<24x32xf32>
    %cst_46 = arith.constant dense<0.000000e+00> : vector<8x32xf32>
    %173 = tpu.matmul %166, %172, %cst_46 {dimension_numbers = #tpu.dot_dimension_numbers<[1], [0], [0], [1], [0, 0, 1, 1], [], []>} : vector<8x24xf32>, vector<24x32xf32>, vector<8x32xf32> -> vector<8x32xf32>
    %174 = vector.broadcast %171 : vector<1x32xf32> to vector<8x32xf32>
    %175 = arith.addf %173, %174 : vector<8x32xf32>
    %cst_47 = arith.constant 0.000000e+00 : f32
    %176 = vector.broadcast %cst_47 : f32 to vector<8x32xf32>
    %177 = arith.maximumf %175, %176 : vector<8x32xf32>
    %c0_48 = arith.constant 0 : index
    %c0_49 = arith.constant 0 : index
    %178 = vector.load %arg12[%c0_48, %c0_49] : memref<32x24xf32, #tpu.memory_space<vmem>>, vector<32x24xf32>
    %cst_50 = arith.constant dense<0.000000e+00> : vector<8x24xf32>
    %179 = tpu.matmul %177, %178, %cst_50 {dimension_numbers = #tpu.dot_dimension_numbers<[1], [0], [0], [1], [0, 0, 1, 1], [], []>} : vector<8x32xf32>, vector<32x24xf32>, vector<8x24xf32> -> vector<8x24xf32>
    %c0_51 = arith.constant 0 : index
    %c0_52 = arith.constant 0 : index
    %180 = vector.load %arg13[%c0_51, %c0_52] : memref<1x24xf32, #tpu.memory_space<vmem>>, vector<1x24xf32>
    %181 = vector.broadcast %180 : vector<1x24xf32> to vector<8x24xf32>
    %182 = arith.addf %179, %181 : vector<8x24xf32>
    %c0_53 = arith.constant 0 : index
    %c0_54 = arith.constant 0 : index
    %183 = vector.load %arg14[%c0_53, %c0_54] : memref<8x24xf32, #tpu.memory_space<vmem>>, vector<8x24xf32>
    tpu.vector_store %arg14[%c0_53, %c0_54], %182 {strides = array<i32>} : memref<8x24xf32, #tpu.memory_space<vmem>>, vector<8x24xf32>,
    return
  }
}

</mosaic_0001>

<llo_original>
// kernel: generator_forward.1
$region0: #{generator_forward.1}
  #allocation0 [shape = 'u32[]', space=smem, size = 0x4, offset = 0x4, fixed_abs, tag = 'smem constant byte address 0x4 - core index']
  #allocation1 [shape = 'u32[144,128]{1,0:T(1,128)}', space=vmem, size = 0x12000, scoped, tag = 'internal scratch']
  %s0 = inlined_call_operand.vmem [shape: f32[64,2], index: 0, kind: input, shape index: {}]
  %s1 = inlined_call_operand.vmem [shape: f32[1,8], index: 1, kind: input, shape index: {}]
  %s2 = inlined_call_operand.vmem [shape: f32[2,16], index: 2, kind: input, shape index: {}]
  %s3 = inlined_call_operand.vmem [shape: f32[1,16], index: 3, kind: input, shape index: {}]
  %s4 = inlined_call_operand.vmem [shape: f32[16,128], index: 4, kind: input, shape index: {}]
  %s5 = inlined_call_operand.vmem [shape: f32[32,128], index: 5, kind: input, shape index: {}]
  %s6 = inlined_call_operand.vmem [shape: f32[1,128], index: 6, kind: input, shape index: {}]
  %s7 = inlined_call_operand.vmem [shape: f32[32,24], index: 7, kind: input, shape index: {}]
  %s8 = inlined_call_operand.vmem [shape: f32[1,24], index: 8, kind: input, shape index: {}]
  %s9 = inlined_call_operand.vmem [shape: f32[24,32], index: 9, kind: input, shape index: {}]
  %s10 = inlined_call_operand.vmem [shape: f32[8,32], index: 10, kind: input, shape index: {}]
  %s11 = inlined_call_operand.vmem [shape: f32[1,32], index: 11, kind: input, shape index: {}]
  %s12 = inlined_call_operand.vmem [shape: f32[32,24], index: 12, kind: input, shape index: {}]
  %s13 = inlined_call_operand.vmem [shape: f32[1,24], index: 13, kind: input, shape index: {}]
  %s14 = inlined_call_operand.vmem [shape: f32[8,24], index: 14, kind: output, shape index: {}]
  %s15 = sld [smem:[#allocation0]]
  $region66: #{generator_forward.1} parent=0
    _
  %s17 = ssub.s32 1, %s15
  %s18 = scalar_select 0, %s17, %s15
  // Predicated region
  $region2: #{generator_forward.1} parent=0 // pred_check
    _
  $region3: #{generator_forward.1} parent=0 // pred_check_branch
    %20 = sbr.rel (0) target = $region5
  $region4: #{generator_forward.1} parent=0 // pred_region
    _
  $region5: #{generator_forward.1} parent=0 // pred_fallthru
    _
  // Predicated region
  $region6: #{generator_forward.1} parent=0 // pred_check
    _
  $region7: #{generator_forward.1} parent=0 // pred_check_branch
    %22 = sbr.rel (0) target = $region9
  $region8: #{generator_forward.1} parent=0 // pred_region
    _
  $region9: #{generator_forward.1} parent=0 // pred_fallthru
    _
  // Predicated region
  $region10: #{generator_forward.1} parent=0 // pred_check
    _
  $region11: #{generator_forward.1} parent=0 // pred_check_branch
    %24 = sbr.rel (0) target = $region13
  $region12: #{generator_forward.1} parent=0 // pred_region
    _
  $region13: #{generator_forward.1} parent=0 // pred_fallthru
    _
  // Predicated region
  $region14: #{generator_forward.1} parent=0 // pred_check
    _
  $region15: #{generator_forward.1} parent=0 // pred_check_branch
    %26 = sbr.rel (0) target = $region17
  $region16: #{generator_forward.1} parent=0 // pred_region
    _
  $region17: #{generator_forward.1} parent=0 // pred_fallthru
    _
  // Predicated region
  $region18: #{generator_forward.1} parent=0 // pred_check
    _
  $region19: #{generator_forward.1} parent=0 // pred_check_branch
    %28 = sbr.rel (0) target = $region21
  $region20: #{generator_forward.1} parent=0 // pred_region
    _
  $region21: #{generator_forward.1} parent=0 // pred_fallthru
    _
  // Predicated region
  $region22: #{generator_forward.1} parent=0 // pred_check
    _
  $region23: #{generator_forward.1} parent=0 // pred_check_branch
    %30 = sbr.rel (0) target = $region25
  $region24: #{generator_forward.1} parent=0 // pred_region
    _
  $region25: #{generator_forward.1} parent=0 // pred_fallthru
    _
  // Predicated region
  $region26: #{generator_forward.1} parent=0 // pred_check
    _
  $region27: #{generator_forward.1} parent=0 // pred_check_branch
    %32 = sbr.rel (0) target = $region29
  $region28: #{generator_forward.1} parent=0 // pred_region
    _
  $region29: #{generator_forward.1} parent=0 // pred_fallthru
    _
  // Predicated region
  $region30: #{generator_forward.1} parent=0 // pred_check
    _
  $region31: #{generator_forward.1} parent=0 // pred_check_branch
    %34 = sbr.rel (0) target = $region33
  $region32: #{generator_forward.1} parent=0 // pred_region
    _
  $region33: #{generator_forward.1} parent=0 // pred_fallthru
    _
  // Predicated region
  $region34: #{generator_forward.1} parent=0 // pred_check
    _
  $region35: #{generator_forward.1} parent=0 // pred_check_branch
    %36 = sbr.rel (0) target = $region37
  $region36: #{generator_forward.1} parent=0 // pred_region
    _
  $region37: #{generator_forward.1} parent=0 // pred_fallthru
    _
  // Predicated region
  $region38: #{generator_forward.1} parent=0 // pred_check
    _
  $region39: #{generator_forward.1} parent=0 // pred_check_branch
    %38 = sbr.rel (0) target = $region41
  $region40: #{generator_forward.1} parent=0 // pred_region
    _
  $region41: #{generator_forward.1} parent=0 // pred_fallthru
    _
  // Predicated region
  $region42: #{generator_forward.1} parent=0 // pred_check
    _
  $region43: #{generator_forward.1} parent=0 // pred_check_branch
    %40 = sbr.rel (0) target = $region45
  $region44: #{generator_forward.1} parent=0 // pred_region
    _
  $region45: #{generator_forward.1} parent=0 // pred_fallthru
    _
  // Predicated region
  $region46: #{generator_forward.1} parent=0 // pred_check
    _
  $region47: #{generator_forward.1} parent=0 // pred_check_branch
    %42 = sbr.rel (0) target = $region49
  $region48: #{generator_forward.1} parent=0 // pred_region
    _
  $region49: #{generator_forward.1} parent=0 // pred_fallthru
    _
  // Predicated region
  $region50: #{generator_forward.1} parent=0 // pred_check
    _
  $region51: #{generator_forward.1} parent=0 // pred_check_branch
    %44 = sbr.rel (0) target = $region53
  $region52: #{generator_forward.1} parent=0 // pred_region
    _
  $region53: #{generator_forward.1} parent=0 // pred_fallthru
    _
  // Predicated region
  $region54: #{generator_forward.1} parent=0 // pred_check
    _
  $region55: #{generator_forward.1} parent=0 // pred_check_branch
    %46 = sbr.rel (0) target = $region57
  $region56: #{generator_forward.1} parent=0 // pred_region
    _
  $region57: #{generator_forward.1} parent=0 // pred_fallthru
    _
  %v47 = vld [vmem:[%s0] sm:$0xff]
  %v48 = vld [vmem:[%s0 + $0x8] sm:$0xff]
  %v49 = vld [vmem:[%s0 + $0x10] sm:$0xff]
  %v50 = vld [vmem:[%s0 + $0x18] sm:$0xff]
  %v51 = vld [vmem:[%s0 + $0x20] sm:$0xff]
  %v52 = vld [vmem:[%s0 + $0x28] sm:$0xff]
  %v53 = vld [vmem:[%s0 + $0x30] sm:$0xff]
  %v54 = vld [vmem:[%s0 + $0x38] sm:$0xff]
  %v55 = vld [vmem:[%s2] sm:$0x3]
  %v56 = vld [vmem:[%s3] sm:$0x1]
  %v58 = vlaneseq
  %v59 = vshrl.u32 %v58, 7
  %v60 = vsub.s32 0, %v59
  %v61 = vrot.slane %v56, %v60
  %vm63 = vcmask 15360
  %v65 = vsel %vm63, %v47, 0
  %v68 = vsel %vm63, %v48, 0
  %v71 = vsel %vm63, %v49, 0
  %v74 = vsel %vm63, %v50, 0
  %v77 = vsel %vm63, %v51, 0
  %v80 = vsel %vm63, %v52, 0
  %v83 = vsel %vm63, %v53, 0
  %v86 = vsel %vm63, %v54, 0
  %vm88 = vcmask 1041408
  %v90 = vsel %vm88, %v55, 0
  %92 = vmatprep.subr.mxu0 0.0
  %93 = vmatpush1.msra.mxu0 0.0
  %94 = vmatprep.subr.mxu0 0.0
  %95 = vmatpush1.msra.mxu0 0.0
  %96 = vmatprep.subr.mxu0 0.0
  %97 = vmatpush1.msra.mxu0 0.0
  %98 = vmatprep.subr.mxu0 0.0
  %99 = vmatpush1.msra.mxu0 0.0
  %100 = vmatprep.subr.mxu0 0.0
  %101 = vmatpush1.msra.mxu0 0.0
  %102 = vmatprep.subr.mxu0 0.0
  %103 = vmatpush1.msra.mxu0 0.0
  %104 = vmatprep.subr.mxu0 0.0
  %105 = vmatpush1.msra.mxu0 0.0
  %106 = vmatprep.subr.mxu0 0.0
  %107 = vmatpush1.msra.mxu0 0.0
  %108 = vmatprep.subr.mxu0 0.0
  %109 = vmatpush1.msra.mxu0 0.0
  %110 = vmatprep.subr.mxu0 0.0
  %111 = vmatpush1.msra.mxu0 0.0
  %112 = vmatprep.subr.mxu0 0.0
  %113 = vmatpush1.msra.mxu0 0.0
  %114 = vmatprep.subr.mxu0 0.0
  %115 = vmatpush1.msra.mxu0 0.0
  %116 = vmatprep.subr.mxu0 0.0
  %117 = vmatpush1.msra.mxu0 0.0
  %118 = vmatprep.subr.mxu0 0.0
  %119 = vmatpush1.msra.mxu0 0.0
  %120 = vmatprep.subr.mxu0 0.0
  %121 = vmatpush1.msra.mxu0 0.0
  %122 = vmatprep.subr.mxu0 0.0
  %123 = vmatpush1.msra.mxu0 %v90
  %124 = vmatprep.subr.mxu0 0.0
  %125 = vmatpush2.msra.mxu0 0.0
  %126 = vmatprep.subr.mxu0 0.0
  %127 = vmatpush2.msra.mxu0 0.0
  %128 = vmatprep.subr.mxu0 0.0
  %129 = vmatpush2.msra.mxu0 0.0
  %130 = vmatprep.subr.mxu0 0.0
  %131 = vmatpush2.msra.mxu0 0.0
  %132 = vmatprep.subr.mxu0 0.0
  %133 = vmatpush2.msra.mxu0 0.0
  %134 = vmatprep.subr.mxu0 0.0
  %135 = vmatpush2.msra.mxu0 0.0
  %136 = vmatprep.subr.mxu0 0.0
  %137 = vmatpush2.msra.mxu0 0.0
  %138 = vmatprep.subr.mxu0 0.0
  %139 = vmatpush2.msra.mxu0 0.0
  %140 = vmatprep.subr.mxu0 0.0
  %141 = vmatpush2.msra.mxu0 0.0
  %142 = vmatprep.subr.mxu0 0.0
  %143 = vmatpush2.msra.mxu0 0.0
  %144 = vmatprep.subr.mxu0 0.0
  %145 = vmatpush2.msra.mxu0 0.0
  %146 = vmatprep.subr.mxu0 0.0
  %147 = vmatpush2.msra.mxu0 0.0
  %148 = vmatprep.subr.mxu0 0.0
  %149 = vmatpush2.msra.mxu0 0.0
  %150 = vmatprep.subr.mxu0 0.0
  %151 = vmatpush2.msra.mxu0 0.0
  %152 = vmatprep.subr.mxu0 0.0
  %153 = vmatpush2.msra.mxu0 0.0
  %154 = vmatprep.subr.mxu0 0.0
  %155 = vmatpush2.msra.mxu0 0.0
  %156 = vmatprep.mubr.f32.mxu0 0.0
  %157 = vmatmul.mubr.f32.gmra.mxu0 %v65
  %v158 = vpop.f32.mrf.mxu0
  %v159 = vadd.f32 %v61, %v158
  %v160 = vpop.f32.mrf.mxu0
  %161 = vmatprep.mubr.f32.mxu0 0.0
  %162 = vmatmul.mubr.f32.gmra.mxu0 %v68
  %v163 = vpop.f32.mrf.mxu0
  %v164 = vadd.f32 %v61, %v163
  %v165 = vpop.f32.mrf.mxu0
  %166 = vmatprep.mubr.f32.mxu0 0.0
  %167 = vmatmul.mubr.f32.gmra.mxu0 %v71
  %v168 = vpop.f32.mrf.mxu0
  %v169 = vadd.f32 %v61, %v168
  %v170 = vpop.f32.mrf.mxu0
  %171 = vmatprep.mubr.f32.mxu0 0.0
  %172 = vmatmul.mubr.f32.gmra.mxu0 %v74
  %v173 = vpop.f32.mrf.mxu0
  %v174 = vadd.f32 %v61, %v173
  %v175 = vpop.f32.mrf.mxu0
  %176 = vmatprep.mubr.f32.mxu0 0.0
  %177 = vmatmul.mubr.f32.gmra.mxu0 %v77
  %v178 = vpop.f32.mrf.mxu0
  %v179 = vadd.f32 %v61, %v178
  %v180 = vpop.f32.mrf.mxu0
  %181 = vmatprep.mubr.f32.mxu0 0.0
  %182 = vmatmul.mubr.f32.gmra.mxu0 %v80
  %v183 = vpop.f32.mrf.mxu0
  %v184 = vadd.f32 %v61, %v183
  %v185 = vpop.f32.mrf.mxu0
  %186 = vmatprep.mubr.f32.mxu0 0.0
  %187 = vmatmul.mubr.f32.gmra.mxu0 %v83
  %v188 = vpop.f32.mrf.mxu0
  %v189 = vadd.f32 %v61, %v188
  %v190 = vpop.f32.mrf.mxu0
  %191 = vmatprep.mubr.f32.mxu0 0.0
  %192 = vmatmul.mubr.f32.gmra.mxu0 %v86
  %v193 = vpop.f32.mrf.mxu0
  %v194 = vadd.f32 %v61, %v193
  %v195 = vpop.f32.mrf.mxu0
  %196 = vdwg.mxu0
  %v197 = vmax.f32 %v159, 0.0
  %v198 = vmax.f32 %v164, 0.0
  %v199 = vmax.f32 %v169, 0.0
  %v200 = vmax.f32 %v174, 0.0
  %v201 = vmax.f32 %v179, 0.0
  %v202 = vmax.f32 %v184, 0.0
  %v203 = vmax.f32 %v189, 0.0
  %v204 = vmax.f32 %v194, 0.0
  %v205 = vld [vmem:[%s4] sm:$0xff]
  %v206 = vld [vmem:[%s4 + $0x8] sm:$0xff]
  %v207 = vld [vmem:[%s6] sm:$0x1]
  %v209 = vlaneseq
  %v210 = vshrl.u32 %v209, 7
  %v211 = vsub.s32 0, %v210
  %v212 = vrot.slane %v207, %v211
  %vm214 = vcmask 130048
  %v216 = vsel %vm214, %v197, 0
  %v219 = vsel %vm214, %v198, 0
  %v222 = vsel %vm214, %v199, 0
  %v225 = vsel %vm214, %v200, 0
  %v228 = vsel %vm214, %v201, 0
  %v231 = vsel %vm214, %v202, 0
  %v234 = vsel %vm214, %v203, 0
  %v237 = vsel %vm214, %v204, 0
  %239 = vmatprep.subr.mxu0 0.0
  %240 = vmatpush1.msra.mxu0 0.0
  %241 = vmatprep.subr.mxu0 0.0
  %242 = vmatpush1.msra.mxu0 0.0
  %243 = vmatprep.subr.mxu0 0.0
  %244 = vmatpush1.msra.mxu0 0.0
  %245 = vmatprep.subr.mxu0 0.0
  %246 = vmatpush1.msra.mxu0 0.0
  %247 = vmatprep.subr.mxu0 0.0
  %248 = vmatpush1.msra.mxu0 0.0
  %249 = vmatprep.subr.mxu0 0.0
  %250 = vmatpush1.msra.mxu0 0.0
  %251 = vmatprep.subr.mxu0 0.0
  %252 = vmatpush1.msra.mxu0 0.0
  %253 = vmatprep.subr.mxu0 0.0
  %254 = vmatpush1.msra.mxu0 0.0
  %255 = vmatprep.subr.mxu0 0.0
  %256 = vmatpush1.msra.mxu0 0.0
  %257 = vmatprep.subr.mxu0 0.0
  %258 = vmatpush1.msra.mxu0 0.0
  %259 = vmatprep.subr.mxu0 0.0
  %260 = vmatpush1.msra.mxu0 0.0
  %261 = vmatprep.subr.mxu0 0.0
  %262 = vmatpush1.msra.mxu0 0.0
  %263 = vmatprep.subr.mxu0 0.0
  %264 = vmatpush1.msra.mxu0 0.0
  %265 = vmatprep.subr.mxu0 0.0
  %266 = vmatpush1.msra.mxu0 0.0
  %267 = vmatprep.subr.mxu0 0.0
  %268 = vmatpush1.msra.mxu0 %v206
  %269 = vmatprep.subr.mxu0 0.0
  %270 = vmatpush1.msra.mxu0 %v205
  %271 = vmatprep.subr.mxu0 0.0
  %272 = vmatpush2.msra.mxu0 0.0
  %273 = vmatprep.subr.mxu0 0.0
  %274 = vmatpush2.msra.mxu0 0.0
  %275 = vmatprep.subr.mxu0 0.0
  %276 = vmatpush2.msra.mxu0 0.0
  %277 = vmatprep.subr.mxu0 0.0
  %278 = vmatpush2.msra.mxu0 0.0
  %279 = vmatprep.subr.mxu0 0.0
  %280 = vmatpush2.msra.mxu0 0.0
  %281 = vmatprep.subr.mxu0 0.0
  %282 = vmatpush2.msra.mxu0 0.0
  %283 = vmatprep.subr.mxu0 0.0
  %284 = vmatpush2.msra.mxu0 0.0
  %285 = vmatprep.subr.mxu0 0.0
  %286 = vmatpush2.msra.mxu0 0.0
  %287 = vmatprep.subr.mxu0 0.0
  %288 = vmatpush2.msra.mxu0 0.0
  %289 = vmatprep.subr.mxu0 0.0
  %290 = vmatpush2.msra.mxu0 0.0
  %291 = vmatprep.subr.mxu0 0.0
  %292 = vmatpush2.msra.mxu0 0.0
  %293 = vmatprep.subr.mxu0 0.0
  %294 = vmatpush2.msra.mxu0 0.0
  %295 = vmatprep.subr.mxu0 0.0
  %296 = vmatpush2.msra.mxu0 0.0
  %297 = vmatprep.subr.mxu0 0.0
  %298 = vmatpush2.msra.mxu0 0.0
  %299 = vmatprep.subr.mxu0 0.0
  %300 = vmatpush2.msra.mxu0 0.0
  %301 = vmatprep.subr.mxu0 0.0
  %302 = vmatpush2.msra.mxu0 0.0
  %303 = vmatprep.mubr.f32.mxu0 0.0
  %304 = vmatmul.mubr.f32.gmra.mxu0 %v216
  %v305 = vpop.f32.mrf.mxu0
  %v306 = vadd.f32 %v212, %v305
  %v307 = vpop.f32.mrf.mxu0
  %308 = vmatprep.mubr.f32.mxu0 0.0
  %309 = vmatmul.mubr.f32.gmra.mxu0 %v219
  %v310 = vpop.f32.mrf.mxu0
  %v311 = vadd.f32 %v212, %v310
  %v312 = vpop.f32.mrf.mxu0
  %313 = vmatprep.mubr.f32.mxu0 0.0
  %314 = vmatmul.mubr.f32.gmra.mxu0 %v222
  %v315 = vpop.f32.mrf.mxu0
  %v316 = vadd.f32 %v212, %v315
  %v317 = vpop.f32.mrf.mxu0
  %318 = vmatprep.mubr.f32.mxu0 0.0
  %319 = vmatmul.mubr.f32.gmra.mxu0 %v225
  %v320 = vpop.f32.mrf.mxu0
  %v321 = vadd.f32 %v212, %v320
  %v322 = vpop.f32.mrf.mxu0
  %323 = vmatprep.mubr.f32.mxu0 0.0
  %324 = vmatmul.mubr.f32.gmra.mxu0 %v228
  %v325 = vpop.f32.mrf.mxu0
  %v326 = vadd.f32 %v212, %v325
  %v327 = vpop.f32.mrf.mxu0
  %328 = vmatprep.mubr.f32.mxu0 0.0
  %329 = vmatmul.mubr.f32.gmra.mxu0 %v231
  %v330 = vpop.f32.mrf.mxu0
  %v331 = vadd.f32 %v212, %v330
  %v332 = vpop.f32.mrf.mxu0
  %333 = vmatprep.mubr.f32.mxu0 0.0
  %334 = vmatmul.mubr.f32.gmra.mxu0 %v234
  %v335 = vpop.f32.mrf.mxu0
  %v336 = vadd.f32 %v212, %v335
  %v337 = vpop.f32.mrf.mxu0
  %338 = vmatprep.mubr.f32.mxu0 0.0
  %339 = vmatmul.mubr.f32.gmra.mxu0 %v237
  %v340 = vpop.f32.mrf.mxu0
  %v341 = vadd.f32 %v212, %v340
  %v342 = vpop.f32.mrf.mxu0
  %343 = vdwg.mxu0
  %v344 = vld [vmem:[%s5] sm:$0xff]
  %v345 = vld [vmem:[%s5 + $0x8] sm:$0xff]
  %v346 = vld [vmem:[%s5 + $0x10] sm:$0xff]
  %v347 = vld [vmem:[%s5 + $0x18] sm:$0xff]
  %vm348 = vcmask 261120
  %v350 = vsel %vm348, 0.0, 0
  %352 = vmatprep.subr.mxu0 0.0
  %353 = vmatpush1.msra.mxu0 0.0
  %354 = vmatprep.subr.mxu0 0.0
  %355 = vmatpush1.msra.mxu0 0.0
  %356 = vmatprep.subr.mxu0 0.0
  %357 = vmatpush1.msra.mxu0 0.0
  %358 = vmatprep.subr.mxu0 0.0
  %359 = vmatpush1.msra.mxu0 0.0
  %360 = vmatprep.subr.mxu0 0.0
  %361 = vmatpush1.msra.mxu0 0.0
  %362 = vmatprep.subr.mxu0 0.0
  %363 = vmatpush1.msra.mxu0 0.0
  %364 = vmatprep.subr.mxu0 0.0
  %365 = vmatpush1.msra.mxu0 0.0
  %366 = vmatprep.subr.mxu0 0.0
  %367 = vmatpush1.msra.mxu0 0.0
  %368 = vmatprep.subr.mxu0 0.0
  %369 = vmatpush1.msra.mxu0 0.0
  %370 = vmatprep.subr.mxu0 0.0
  %371 = vmatpush1.msra.mxu0 0.0
  %372 = vmatprep.subr.mxu0 0.0
  %373 = vmatpush1.msra.mxu0 0.0
  %374 = vmatprep.subr.mxu0 0.0
  %375 = vmatpush1.msra.mxu0 0.0
  %376 = vmatprep.subr.mxu0 0.0
  %377 = vmatpush1.msra.mxu0 %v347
  %378 = vmatprep.subr.mxu0 0.0
  %379 = vmatpush1.msra.mxu0 %v346
  %380 = vmatprep.subr.mxu0 0.0
  %381 = vmatpush1.msra.mxu0 %v345
  %382 = vmatprep.subr.mxu0 0.0
  %383 = vmatpush1.msra.mxu0 %v344
  %384 = vmatprep.subr.mxu0 0.0
  %385 = vmatpush2.msra.mxu0 0.0
  %386 = vmatprep.subr.mxu0 0.0
  %387 = vmatpush2.msra.mxu0 0.0
  %388 = vmatprep.subr.mxu0 0.0
  %389 = vmatpush2.msra.mxu0 0.0
  %390 = vmatprep.subr.mxu0 0.0
  %391 = vmatpush2.msra.mxu0 0.0
  %392 = vmatprep.subr.mxu0 0.0
  %393 = vmatpush2.msra.mxu0 0.0
  %394 = vmatprep.subr.mxu0 0.0
  %395 = vmatpush2.msra.mxu0 0.0
  %396 = vmatprep.subr.mxu0 0.0
  %397 = vmatpush2.msra.mxu0 0.0
  %398 = vmatprep.subr.mxu0 0.0
  %399 = vmatpush2.msra.mxu0 0.0
  %400 = vmatprep.subr.mxu0 0.0
  %401 = vmatpush2.msra.mxu0 0.0
  %402 = vmatprep.subr.mxu0 0.0
  %403 = vmatpush2.msra.mxu0 0.0
  %404 = vmatprep.subr.mxu0 0.0
  %405 = vmatpush2.msra.mxu0 0.0
  %406 = vmatprep.subr.mxu0 0.0
  %407 = vmatpush2.msra.mxu0 0.0
  %408 = vmatprep.subr.mxu0 0.0
  %409 = vmatpush2.msra.mxu0 0.0
  %410 = vmatprep.subr.mxu0 0.0
  %411 = vmatpush2.msra.mxu0 0.0
  %412 = vmatprep.subr.mxu0 0.0
  %413 = vmatpush2.msra.mxu0 0.0
  %414 = vmatprep.subr.mxu0 0.0
  %415 = vmatpush2.msra.mxu0 0.0
  %416 = vmatprep.mubr.f32.mxu0 0.0
  %417 = vmatmul.mubr.f32.gmra.mxu0 %v350
  %v418 = vpop.f32.mrf.mxu0
  %v419 = vadd.f32 0.0, %v418
  %v420 = vpop.f32.mrf.mxu0
  %421 = vdwg.mxu0
  %v422 = vadd.f32 %v306, %v419
  %v423 = vxor.u32 %v422, 2147483648
  %v424 = vmul.f32 %v423, 1.442695
  %v425 = vpow.pop %v424
  %v426 = vadd.f32 %v425, 1.0
  %v427 = vrcp.pop %v426
  %v428 = vmul.f32 1.0, %v427
  %v429 = vtanh.pop %v422
  %v430 = vmul.f32 %v428, 0.0
  %432 = vrot.lane.b32.xlu0 %v429, 64
  %v433 = vpop.permute.xlu0 %432
  %v435 = vmul.f32 %v428, %v433
  %437 = vrot.lane.b32.xlu0 %v435, 32
  %v438 = vpop.permute.xlu0 %437
  %v440 = vadd.f32 %v430, %v438
  %v441 = vtanh.pop %v440
  %443 = vrot.lane.b32.xlu0 %v441, 64
  %v444 = vpop.permute.xlu0 %443
  %v446 = vmul.f32 %v428, %v444
  %448 = vrot.lane.b32.xlu0 %v446, 32
  %v449 = vpop.permute.xlu0 %448
  %v450 = vsel %vm348, %v449, 0
  %452 = vmatprep.subr.mxu0 0.0
  %453 = vmatpush1.msra.mxu0 0.0
  %454 = vmatprep.subr.mxu0 0.0
  %455 = vmatpush1.msra.mxu0 0.0
  %456 = vmatprep.subr.mxu0 0.0
  %457 = vmatpush1.msra.mxu0 0.0
  %458 = vmatprep.subr.mxu0 0.0
  %459 = vmatpush1.msra.mxu0 0.0
  %460 = vmatprep.subr.mxu0 0.0
  %461 = vmatpush1.msra.mxu0 0.0
  %462 = vmatprep.subr.mxu0 0.0
  %463 = vmatpush1.msra.mxu0 0.0
  %464 = vmatprep.subr.mxu0 0.0
  %465 = vmatpush1.msra.mxu0 0.0
  %466 = vmatprep.subr.mxu0 0.0
  %467 = vmatpush1.msra.mxu0 0.0
  %468 = vmatprep.subr.mxu0 0.0
  %469 = vmatpush1.msra.mxu0 0.0
  %470 = vmatprep.subr.mxu0 0.0
  %471 = vmatpush1.msra.mxu0 0.0
  %472 = vmatprep.subr.mxu0 0.0
  %473 = vmatpush1.msra.mxu0 0.0
  %474 = vmatprep.subr.mxu0 0.0
  %475 = vmatpush1.msra.mxu0 0.0
  %476 = vmatprep.subr.mxu0 0.0
  %477 = vmatpush1.msra.mxu0 %v347
  %478 = vmatprep.subr.mxu0 0.0
  %479 = vmatpush1.msra.mxu0 %v346
  %480 = vmatprep.subr.mxu0 0.0
  %481 = vmatpush1.msra.mxu0 %v345
  %482 = vmatprep.subr.mxu0 0.0
  %483 = vmatpush1.msra.mxu0 %v344
  %484 = vmatprep.subr.mxu0 0.0
  %485 = vmatpush2.msra.mxu0 0.0
  %486 = vmatprep.subr.mxu0 0.0
  %487 = vmatpush2.msra.mxu0 0.0
  %488 = vmatprep.subr.mxu0 0.0
  %489 = vmatpush2.msra.mxu0 0.0
  %490 = vmatprep.subr.mxu0 0.0
  %491 = vmatpush2.msra.mxu0 0.0
  %492 = vmatprep.subr.mxu0 0.0
  %493 = vmatpush2.msra.mxu0 0.0
  %494 = vmatprep.subr.mxu0 0.0
  %495 = vmatpush2.msra.mxu0 0.0
  %496 = vmatprep.subr.mxu0 0.0
  %497 = vmatpush2.msra.mxu0 0.0
  %498 = vmatprep.subr.mxu0 0.0
  %499 = vmatpush2.msra.mxu0 0.0
  %500 = vmatprep.subr.mxu0 0.0
  %501 = vmatpush2.msra.mxu0 0.0
  %502 = vmatprep.subr.mxu0 0.0
  %503 = vmatpush2.msra.mxu0 0.0
  %504 = vmatprep.subr.mxu0 0.0
  %505 = vmatpush2.msra.mxu0 0.0
  %506 = vmatprep.subr.mxu0 0.0
  %507 = vmatpush2.msra.mxu0 0.0
  %508 = vmatprep.subr.mxu0 0.0
  %509 = vmatpush2.msra.mxu0 0.0
  %510 = vmatprep.subr.mxu0 0.0
  %511 = vmatpush2.msra.mxu0 0.0
  %512 = vmatprep.subr.mxu0 0.0
  %513 = vmatpush2.msra.mxu0 0.0
  %514 = vmatprep.subr.mxu0 0.0
  %515 = vmatpush2.msra.mxu0 0.0
  %516 = vmatprep.mubr.f32.mxu0 0.0
  %517 = vmatmul.mubr.f32.gmra.mxu0 %v450
  %v518 = vpop.f32.mrf.mxu0
  %v519 = vadd.f32 0.0, %v518
  %v520 = vpop.f32.mrf.mxu0
  %521 = vdwg.mxu0
  %v522 = vadd.f32 %v311, %v519
  %v523 = vxor.u32 %v522, 2147483648
  %v524 = vmul.f32 %v523, 1.442695
  %v525 = vpow.pop %v524
  %v526 = vadd.f32 %v525, 1.0
  %v527 = vrcp.pop %v526
  %v528 = vmul.f32 1.0, %v527
  %v529 = vtanh.pop %v522
  %v530 = vmul.f32 %v528, %v440
  %532 = vrot.lane.b32.xlu0 %v529, 64
  %v533 = vpop.permute.xlu0 %532
  %v535 = vmul.f32 %v528, %v533
  %537 = vrot.lane.b32.xlu0 %v535, 32
  %v538 = vpop.permute.xlu0 %537
  %v540 = vadd.f32 %v530, %v538
  %v541 = vtanh.pop %v540
  %543 = vrot.lane.b32.xlu0 %v541, 64
  %v544 = vpop.permute.xlu0 %543
  %v546 = vmul.f32 %v528, %v544
  %548 = vrot.lane.b32.xlu0 %v546, 32
  %v549 = vpop.permute.xlu0 %548
  %v550 = vsel %vm348, %v549, 0
  %552 = vmatprep.subr.mxu0 0.0
  %553 = vmatpush1.msra.mxu0 0.0
  %554 = vmatprep.subr.mxu0 0.0
  %555 = vmatpush1.msra.mxu0 0.0
  %556 = vmatprep.subr.mxu0 0.0
  %557 = vmatpush1.msra.mxu0 0.0
  %558 = vmatprep.subr.mxu0 0.0
  %559 = vmatpush1.msra.mxu0 0.0
  %560 = vmatprep.subr.mxu0 0.0
  %561 = vmatpush1.msra.mxu0 0.0
  %562 = vmatprep.subr.mxu0 0.0
  %563 = vmatpush1.msra.mxu0 0.0
  %564 = vmatprep.subr.mxu0 0.0
  %565 = vmatpush1.msra.mxu0 0.0
  %566 = vmatprep.subr.mxu0 0.0
  %567 = vmatpush1.msra.mxu0 0.0
  %568 = vmatprep.subr.mxu0 0.0
  %569 = vmatpush1.msra.mxu0 0.0
  %570 = vmatprep.subr.mxu0 0.0
  %571 = vmatpush1.msra.mxu0 0.0
  %572 = vmatprep.subr.mxu0 0.0
  %573 = vmatpush1.msra.mxu0 0.0
  %574 = vmatprep.subr.mxu0 0.0
  %575 = vmatpush1.msra.mxu0 0.0
  %576 = vmatprep.subr.mxu0 0.0
  %577 = vmatpush1.msra.mxu0 %v347
  %578 = vmatprep.subr.mxu0 0.0
  %579 = vmatpush1.msra.mxu0 %v346
  %580 = vmatprep.subr.mxu0 0.0
  %581 = vmatpush1.msra.mxu0 %v345
  %582 = vmatprep.subr.mxu0 0.0
  %583 = vmatpush1.msra.mxu0 %v344
  %584 = vmatprep.subr.mxu0 0.0
  %585 = vmatpush2.msra.mxu0 0.0
  %586 = vmatprep.subr.mxu0 0.0
  %587 = vmatpush2.msra.mxu0 0.0
  %588 = vmatprep.subr.mxu0 0.0
  %589 = vmatpush2.msra.mxu0 0.0
  %590 = vmatprep.subr.mxu0 0.0
  %591 = vmatpush2.msra.mxu0 0.0
  %592 = vmatprep.subr.mxu0 0.0
  %593 = vmatpush2.msra.mxu0 0.0
  %594 = vmatprep.subr.mxu0 0.0
  %595 = vmatpush2.msra.mxu0 0.0
  %596 = vmatprep.subr.mxu0 0.0
  %597 = vmatpush2.msra.mxu0 0.0
  %598 = vmatprep.subr.mxu0 0.0
  %599 = vmatpush2.msra.mxu0 0.0
  %600 = vmatprep.subr.mxu0 0.0
  %601 = vmatpush2.msra.mxu0 0.0
  %602 = vmatprep.subr.mxu0 0.0
  %603 = vmatpush2.msra.mxu0 0.0
  %604 = vmatprep.subr.mxu0 0.0
  %605 = vmatpush2.msra.mxu0 0.0
  %606 = vmatprep.subr.mxu0 0.0
  %607 = vmatpush2.msra.mxu0 0.0
  %608 = vmatprep.subr.mxu0 0.0
  %609 = vmatpush2.msra.mxu0 0.0
  %610 = vmatprep.subr.mxu0 0.0
  %611 = vmatpush2.msra.mxu0 0.0
  %612 = vmatprep.subr.mxu0 0.0
  %613 = vmatpush2.msra.mxu0 0.0
  %614 = vmatprep.subr.mxu0 0.0
  %615 = vmatpush2.msra.mxu0 0.0
  %616 = vmatprep.mubr.f32.mxu0 0.0
  %617 = vmatmul.mubr.f32.gmra.mxu0 %v550
  %v618 = vpop.f32.mrf.mxu0
  %v619 = vadd.f32 0.0, %v618
  %v620 = vpop.f32.mrf.mxu0
  %621 = vdwg.mxu0
  %v622 = vadd.f32 %v316, %v619
  %v623 = vxor.u32 %v622, 2147483648
  %v624 = vmul.f32 %v623, 1.442695
  %v625 = vpow.pop %v624
  %v626 = vadd.f32 %v625, 1.0
  %v627 = vrcp.pop %v626
  %v628 = vmul.f32 1.0, %v627
  %v629 = vtanh.pop %v622
  %v630 = vmul.f32 %v628, %v540
  %632 = vrot.lane.b32.xlu0 %v629, 64
  %v633 = vpop.permute.xlu0 %632
  %v635 = vmul.f32 %v628, %v633
  %637 = vrot.lane.b32.xlu0 %v635, 32
  %v638 = vpop.permute.xlu0 %637
  %v640 = vadd.f32 %v630, %v638
  %v641 = vtanh.pop %v640
  %643 = vrot.lane.b32.xlu0 %v641, 64
  %v644 = vpop.permute.xlu0 %643
  %v646 = vmul.f32 %v628, %v644
  %648 = vrot.lane.b32.xlu0 %v646, 32
  %v649 = vpop.permute.xlu0 %648
  %v650 = vsel %vm348, %v649, 0
  %652 = vmatprep.subr.mxu0 0.0
  %653 = vmatpush1.msra.mxu0 0.0
  %654 = vmatprep.subr.mxu0 0.0
  %655 = vmatpush1.msra.mxu0 0.0
  %656 = vmatprep.subr.mxu0 0.0
  %657 = vmatpush1.msra.mxu0 0.0
  %658 = vmatprep.subr.mxu0 0.0
  %659 = vmatpush1.msra.mxu0 0.0
  %660 = vmatprep.subr.mxu0 0.0
  %661 = vmatpush1.msra.mxu0 0.0
  %662 = vmatprep.subr.mxu0 0.0
  %663 = vmatpush1.msra.mxu0 0.0
  %664 = vmatprep.subr.mxu0 0.0
  %665 = vmatpush1.msra.mxu0 0.0
  %666 = vmatprep.subr.mxu0 0.0
  %667 = vmatpush1.msra.mxu0 0.0
  %668 = vmatprep.subr.mxu0 0.0
  %669 = vmatpush1.msra.mxu0 0.0
  %670 = vmatprep.subr.mxu0 0.0
  %671 = vmatpush1.msra.mxu0 0.0
  %672 = vmatprep.subr.mxu0 0.0
  %673 = vmatpush1.msra.mxu0 0.0
  %674 = vmatprep.subr.mxu0 0.0
  %675 = vmatpush1.msra.mxu0 0.0
  %676 = vmatprep.subr.mxu0 0.0
  %677 = vmatpush1.msra.mxu0 %v347
  %678 = vmatprep.subr.mxu0 0.0
  %679 = vmatpush1.msra.mxu0 %v346
  %680 = vmatprep.subr.mxu0 0.0
  %681 = vmatpush1.msra.mxu0 %v345
  %682 = vmatprep.subr.mxu0 0.0
  %683 = vmatpush1.msra.mxu0 %v344
  %684 = vmatprep.subr.mxu0 0.0
  %685 = vmatpush2.msra.mxu0 0.0
  %686 = vmatprep.subr.mxu0 0.0
  %687 = vmatpush2.msra.mxu0 0.0
  %688 = vmatprep.subr.mxu0 0.0
  %689 = vmatpush2.msra.mxu0 0.0
  %690 = vmatprep.subr.mxu0 0.0
  %691 = vmatpush2.msra.mxu0 0.0
  %692 = vmatprep.subr.mxu0 0.0
  %693 = vmatpush2.msra.mxu0 0.0
  %694 = vmatprep.subr.mxu0 0.0
  %695 = vmatpush2.msra.mxu0 0.0
  %696 = vmatprep.subr.mxu0 0.0
  %697 = vmatpush2.msra.mxu0 0.0
  %698 = vmatprep.subr.mxu0 0.0
  %699 = vmatpush2.msra.mxu0 0.0
  %700 = vmatprep.subr.mxu0 0.0
  %701 = vmatpush2.msra.mxu0 0.0
  %702 = vmatprep.subr.mxu0 0.0
  %703 = vmatpush2.msra.mxu0 0.0
  %704 = vmatprep.subr.mxu0 0.0
  %705 = vmatpush2.msra.mxu0 0.0
  %706 = vmatprep.subr.mxu0 0.0
  %707 = vmatpush2.msra.mxu0 0.0
  %708 = vmatprep.subr.mxu0 0.0
  %709 = vmatpush2.msra.mxu0 0.0
  %710 = vmatprep.subr.mxu0 0.0
  %711 = vmatpush2.msra.mxu0 0.0
  %712 = vmatprep.subr.mxu0 0.0
  %713 = vmatpush2.msra.mxu0 0.0
  %714 = vmatprep.subr.mxu0 0.0
  %715 = vmatpush2.msra.mxu0 0.0
  %716 = vmatprep.mubr.f32.mxu0 0.0
  %717 = vmatmul.mubr.f32.gmra.mxu0 %v650
  %v718 = vpop.f32.mrf.mxu0
  %v719 = vadd.f32 0.0, %v718
  %v720 = vpop.f32.mrf.mxu0
  %721 = vdwg.mxu0
  %v722 = vadd.f32 %v321, %v719
  %v723 = vxor.u32 %v722, 2147483648
  %v724 = vmul.f32 %v723, 1.442695
  %v725 = vpow.pop %v724
  %v726 = vadd.f32 %v725, 1.0
  %v727 = vrcp.pop %v726
  %v728 = vmul.f32 1.0, %v727
  %v729 = vtanh.pop %v722
  %v730 = vmul.f32 %v728, %v640
  %732 = vrot.lane.b32.xlu0 %v729, 64
  %v733 = vpop.permute.xlu0 %732
  %v735 = vmul.f32 %v728, %v733
  %737 = vrot.lane.b32.xlu0 %v735, 32
  %v738 = vpop.permute.xlu0 %737
  %v740 = vadd.f32 %v730, %v738
  %v741 = vtanh.pop %v740
  %743 = vrot.lane.b32.xlu0 %v741, 64
  %v744 = vpop.permute.xlu0 %743
  %v746 = vmul.f32 %v728, %v744
  %748 = vrot.lane.b32.xlu0 %v746, 32
  %v749 = vpop.permute.xlu0 %748
  %v750 = vsel %vm348, %v749, 0
  %752 = vmatprep.subr.mxu0 0.0
  %753 = vmatpush1.msra.mxu0 0.0
  %754 = vmatprep.subr.mxu0 0.0
  %755 = vmatpush1.msra.mxu0 0.0
  %756 = vmatprep.subr.mxu0 0.0
  %757 = vmatpush1.msra.mxu0 0.0
  %758 = vmatprep.subr.mxu0 0.0
  %759 = vmatpush1.msra.mxu0 0.0
  %760 = vmatprep.subr.mxu0 0.0
  %761 = vmatpush1.msra.mxu0 0.0
  %762 = vmatprep.subr.mxu0 0.0
  %763 = vmatpush1.msra.mxu0 0.0
  %764 = vmatprep.subr.mxu0 0.0
  %765 = vmatpush1.msra.mxu0 0.0
  %766 = vmatprep.subr.mxu0 0.0
  %767 = vmatpush1.msra.mxu0 0.0
  %768 = vmatprep.subr.mxu0 0.0
  %769 = vmatpush1.msra.mxu0 0.0
  %770 = vmatprep.subr.mxu0 0.0
  %771 = vmatpush1.msra.mxu0 0.0
  %772 = vmatprep.subr.mxu0 0.0
  %773 = vmatpush1.msra.mxu0 0.0
  %774 = vmatprep.subr.mxu0 0.0
  %775 = vmatpush1.msra.mxu0 0.0
  %776 = vmatprep.subr.mxu0 0.0
  %777 = vmatpush1.msra.mxu0 %v347
  %778 = vmatprep.subr.mxu0 0.0
  %779 = vmatpush1.msra.mxu0 %v346
  %780 = vmatprep.subr.mxu0 0.0
  %781 = vmatpush1.msra.mxu0 %v345
  %782 = vmatprep.subr.mxu0 0.0
  %783 = vmatpush1.msra.mxu0 %v344
  %784 = vmatprep.subr.mxu0 0.0
  %785 = vmatpush2.msra.mxu0 0.0
  %786 = vmatprep.subr.mxu0 0.0
  %787 = vmatpush2.msra.mxu0 0.0
  %788 = vmatprep.subr.mxu0 0.0
  %789 = vmatpush2.msra.mxu0 0.0
  %790 = vmatprep.subr.mxu0 0.0
  %791 = vmatpush2.msra.mxu0 0.0
  %792 = vmatprep.subr.mxu0 0.0
  %793 = vmatpush2.msra.mxu0 0.0
  %794 = vmatprep.subr.mxu0 0.0
  %795 = vmatpush2.msra.mxu0 0.0
  %796 = vmatprep.subr.mxu0 0.0
  %797 = vmatpush2.msra.mxu0 0.0
  %798 = vmatprep.subr.mxu0 0.0
  %799 = vmatpush2.msra.mxu0 0.0
  %800 = vmatprep.subr.mxu0 0.0
  %801 = vmatpush2.msra.mxu0 0.0
  %802 = vmatprep.subr.mxu0 0.0
  %803 = vmatpush2.msra.mxu0 0.0
  %804 = vmatprep.subr.mxu0 0.0
  %805 = vmatpush2.msra.mxu0 0.0
  %806 = vmatprep.subr.mxu0 0.0
  %807 = vmatpush2.msra.mxu0 0.0
  %808 = vmatprep.subr.mxu0 0.0
  %809 = vmatpush2.msra.mxu0 0.0
  %810 = vmatprep.subr.mxu0 0.0
  %811 = vmatpush2.msra.mxu0 0.0
  %812 = vmatprep.subr.mxu0 0.0
  %813 = vmatpush2.msra.mxu0 0.0
  %814 = vmatprep.subr.mxu0 0.0
  %815 = vmatpush2.msra.mxu0 0.0
  %816 = vmatprep.mubr.f32.mxu0 0.0
  %817 = vmatmul.mubr.f32.gmra.mxu0 %v750
  %v818 = vpop.f32.mrf.mxu0
  %v819 = vadd.f32 0.0, %v818
  %v820 = vpop.f32.mrf.mxu0
  %821 = vdwg.mxu0
  %v822 = vadd.f32 %v326, %v819
  %v823 = vxor.u32 %v822, 2147483648
  %v824 = vmul.f32 %v823, 1.442695
  %v825 = vpow.pop %v824
  %v826 = vadd.f32 %v825, 1.0
  %v827 = vrcp.pop %v826
  %v828 = vmul.f32 1.0, %v827
  %v829 = vtanh.pop %v822
  %v830 = vmul.f32 %v828, %v740
  %832 = vrot.lane.b32.xlu0 %v829, 64
  %v833 = vpop.permute.xlu0 %832
  %v835 = vmul.f32 %v828, %v833
  %837 = vrot.lane.b32.xlu0 %v835, 32
  %v838 = vpop.permute.xlu0 %837
  %v840 = vadd.f32 %v830, %v838
  %v841 = vtanh.pop %v840
  %843 = vrot.lane.b32.xlu0 %v841, 64
  %v844 = vpop.permute.xlu0 %843
  %v846 = vmul.f32 %v828, %v844
  %848 = vrot.lane.b32.xlu0 %v846, 32
  %v849 = vpop.permute.xlu0 %848
  %v850 = vsel %vm348, %v849, 0
  %852 = vmatprep.subr.mxu0 0.0
  %853 = vmatpush1.msra.mxu0 0.0
  %854 = vmatprep.subr.mxu0 0.0
  %855 = vmatpush1.msra.mxu0 0.0
  %856 = vmatprep.subr.mxu0 0.0
  %857 = vmatpush1.msra.mxu0 0.0
  %858 = vmatprep.subr.mxu0 0.0
  %859 = vmatpush1.msra.mxu0 0.0
  %860 = vmatprep.subr.mxu0 0.0
  %861 = vmatpush1.msra.mxu0 0.0
  %862 = vmatprep.subr.mxu0 0.0
  %863 = vmatpush1.msra.mxu0 0.0
  %864 = vmatprep.subr.mxu0 0.0
  %865 = vmatpush1.msra.mxu0 0.0
  %866 = vmatprep.subr.mxu0 0.0
  %867 = vmatpush1.msra.mxu0 0.0
  %868 = vmatprep.subr.mxu0 0.0
  %869 = vmatpush1.msra.mxu0 0.0
  %870 = vmatprep.subr.mxu0 0.0
  %871 = vmatpush1.msra.mxu0 0.0
  %872 = vmatprep.subr.mxu0 0.0
  %873 = vmatpush1.msra.mxu0 0.0
  %874 = vmatprep.subr.mxu0 0.0
  %875 = vmatpush1.msra.mxu0 0.0
  %876 = vmatprep.subr.mxu0 0.0
  %877 = vmatpush1.msra.mxu0 %v347
  %878 = vmatprep.subr.mxu0 0.0
  %879 = vmatpush1.msra.mxu0 %v346
  %880 = vmatprep.subr.mxu0 0.0
  %881 = vmatpush1.msra.mxu0 %v345
  %882 = vmatprep.subr.mxu0 0.0
  %883 = vmatpush1.msra.mxu0 %v344
  %884 = vmatprep.subr.mxu0 0.0
  %885 = vmatpush2.msra.mxu0 0.0
  %886 = vmatprep.subr.mxu0 0.0
  %887 = vmatpush2.msra.mxu0 0.0
  %888 = vmatprep.subr.mxu0 0.0
  %889 = vmatpush2.msra.mxu0 0.0
  %890 = vmatprep.subr.mxu0 0.0
  %891 = vmatpush2.msra.mxu0 0.0
  %892 = vmatprep.subr.mxu0 0.0
  %893 = vmatpush2.msra.mxu0 0.0
  %894 = vmatprep.subr.mxu0 0.0
  %895 = vmatpush2.msra.mxu0 0.0
  %896 = vmatprep.subr.mxu0 0.0
  %897 = vmatpush2.msra.mxu0 0.0
  %898 = vmatprep.subr.mxu0 0.0
  %899 = vmatpush2.msra.mxu0 0.0
  %900 = vmatprep.subr.mxu0 0.0
  %901 = vmatpush2.msra.mxu0 0.0
  %902 = vmatprep.subr.mxu0 0.0
  %903 = vmatpush2.msra.mxu0 0.0
  %904 = vmatprep.subr.mxu0 0.0
  %905 = vmatpush2.msra.mxu0 0.0
  %906 = vmatprep.subr.mxu0 0.0
  %907 = vmatpush2.msra.mxu0 0.0
  %908 = vmatprep.subr.mxu0 0.0
  %909 = vmatpush2.msra.mxu0 0.0
  %910 = vmatprep.subr.mxu0 0.0
  %911 = vmatpush2.msra.mxu0 0.0
  %912 = vmatprep.subr.mxu0 0.0
  %913 = vmatpush2.msra.mxu0 0.0
  %914 = vmatprep.subr.mxu0 0.0
  %915 = vmatpush2.msra.mxu0 0.0
  %916 = vmatprep.mubr.f32.mxu0 0.0
  %917 = vmatmul.mubr.f32.gmra.mxu0 %v850
  %v918 = vpop.f32.mrf.mxu0
  %v919 = vadd.f32 0.0, %v918
  %v920 = vpop.f32.mrf.mxu0
  %921 = vdwg.mxu0
  %v922 = vadd.f32 %v331, %v919
  %v923 = vxor.u32 %v922, 2147483648
  %v924 = vmul.f32 %v923, 1.442695
  %v925 = vpow.pop %v924
  %v926 = vadd.f32 %v925, 1.0
  %v927 = vrcp.pop %v926
  %v928 = vmul.f32 1.0, %v927
  %v929 = vtanh.pop %v922
  %v930 = vmul.f32 %v928, %v840
  %932 = vrot.lane.b32.xlu0 %v929, 64
  %v933 = vpop.permute.xlu0 %932
  %v935 = vmul.f32 %v928, %v933
  %937 = vrot.lane.b32.xlu0 %v935, 32
  %v938 = vpop.permute.xlu0 %937
  %v940 = vadd.f32 %v930, %v938
  %v941 = vtanh.pop %v940
  %943 = vrot.lane.b32.xlu0 %v941, 64
  %v944 = vpop.permute.xlu0 %943
  %v946 = vmul.f32 %v928, %v944
  %948 = vrot.lane.b32.xlu0 %v946, 32
  %v949 = vpop.permute.xlu0 %948
  %v950 = vsel %vm348, %v949, 0
  %952 = vmatprep.subr.mxu0 0.0
  %953 = vmatpush1.msra.mxu0 0.0
  %954 = vmatprep.subr.mxu0 0.0
  %955 = vmatpush1.msra.mxu0 0.0
  %956 = vmatprep.subr.mxu0 0.0
  %957 = vmatpush1.msra.mxu0 0.0
  %958 = vmatprep.subr.mxu0 0.0
  %959 = vmatpush1.msra.mxu0 0.0
  %960 = vmatprep.subr.mxu0 0.0
  %961 = vmatpush1.msra.mxu0 0.0
  %962 = vmatprep.subr.mxu0 0.0
  %963 = vmatpush1.msra.mxu0 0.0
  %964 = vmatprep.subr.mxu0 0.0
  %965 = vmatpush1.msra.mxu0 0.0
  %966 = vmatprep.subr.mxu0 0.0
  %967 = vmatpush1.msra.mxu0 0.0
  %968 = vmatprep.subr.mxu0 0.0
  %969 = vmatpush1.msra.mxu0 0.0
  %970 = vmatprep.subr.mxu0 0.0
  %971 = vmatpush1.msra.mxu0 0.0
  %972 = vmatprep.subr.mxu0 0.0
  %973 = vmatpush1.msra.mxu0 0.0
  %974 = vmatprep.subr.mxu0 0.0
  %975 = vmatpush1.msra.mxu0 0.0
  %976 = vmatprep.subr.mxu0 0.0
  %977 = vmatpush1.msra.mxu0 %v347
  %978 = vmatprep.subr.mxu0 0.0
  %979 = vmatpush1.msra.mxu0 %v346
  %980 = vmatprep.subr.mxu0 0.0
  %981 = vmatpush1.msra.mxu0 %v345
  %982 = vmatprep.subr.mxu0 0.0
  %983 = vmatpush1.msra.mxu0 %v344
  %984 = vmatprep.subr.mxu0 0.0
  %985 = vmatpush2.msra.mxu0 0.0
  %986 = vmatprep.subr.mxu0 0.0
  %987 = vmatpush2.msra.mxu0 0.0
  %988 = vmatprep.subr.mxu0 0.0
  %989 = vmatpush2.msra.mxu0 0.0
  %990 = vmatprep.subr.mxu0 0.0
  %991 = vmatpush2.msra.mxu0 0.0
  %992 = vmatprep.subr.mxu0 0.0
  %993 = vmatpush2.msra.mxu0 0.0
  %994 = vmatprep.subr.mxu0 0.0
  %995 = vmatpush2.msra.mxu0 0.0
  %996 = vmatprep.subr.mxu0 0.0
  %997 = vmatpush2.msra.mxu0 0.0
  %998 = vmatprep.subr.mxu0 0.0
  %999 = vmatpush2.msra.mxu0 0.0
  %1000 = vmatprep.subr.mxu0 0.0
  %1001 = vmatpush2.msra.mxu0 0.0
  %1002 = vmatprep.subr.mxu0 0.0
  %1003 = vmatpush2.msra.mxu0 0.0
  %1004 = vmatprep.subr.mxu0 0.0
  %1005 = vmatpush2.msra.mxu0 0.0
  %1006 = vmatprep.subr.mxu0 0.0
  %1007 = vmatpush2.msra.mxu0 0.0
  %1008 = vmatprep.subr.mxu0 0.0
  %1009 = vmatpush2.msra.mxu0 0.0
  %1010 = vmatprep.subr.mxu0 0.0
  %1011 = vmatpush2.msra.mxu0 0.0
  %1012 = vmatprep.subr.mxu0 0.0
  %1013 = vmatpush2.msra.mxu0 0.0
  %1014 = vmatprep.subr.mxu0 0.0
  %1015 = vmatpush2.msra.mxu0 0.0
  %1016 = vmatprep.mubr.f32.mxu0 0.0
  %1017 = vmatmul.mubr.f32.gmra.mxu0 %v950
  %v1018 = vpop.f32.mrf.mxu0
  %v1019 = vadd.f32 0.0, %v1018
  %v1020 = vpop.f32.mrf.mxu0
  %1021 = vdwg.mxu0
  %v1022 = vadd.f32 %v336, %v1019
  %v1023 = vxor.u32 %v1022, 2147483648
  %v1024 = vmul.f32 %v1023, 1.442695
  %v1025 = vpow.pop %v1024
  %v1026 = vadd.f32 %v1025, 1.0
  %v1027 = vrcp.pop %v1026
  %v1028 = vmul.f32 1.0, %v1027
  %v1029 = vtanh.pop %v1022
  %v1030 = vmul.f32 %v1028, %v940
  %1032 = vrot.lane.b32.xlu0 %v1029, 64
  %v1033 = vpop.permute.xlu0 %1032
  %v1035 = vmul.f32 %v1028, %v1033
  %1037 = vrot.lane.b32.xlu0 %v1035, 32
  %v1038 = vpop.permute.xlu0 %1037
  %v1040 = vadd.f32 %v1030, %v1038
  %v1041 = vtanh.pop %v1040
  %1043 = vrot.lane.b32.xlu0 %v1041, 64
  %v1044 = vpop.permute.xlu0 %1043
  %v1046 = vmul.f32 %v1028, %v1044
  %1048 = vrot.lane.b32.xlu0 %v1046, 32
  %v1049 = vpop.permute.xlu0 %1048
  %v1050 = vsel %vm348, %v1049, 0
  %1052 = vmatprep.subr.mxu0 0.0
  %1053 = vmatpush1.msra.mxu0 0.0
  %1054 = vmatprep.subr.mxu0 0.0
  %1055 = vmatpush1.msra.mxu0 0.0
  %1056 = vmatprep.subr.mxu0 0.0
  %1057 = vmatpush1.msra.mxu0 0.0
  %1058 = vmatprep.subr.mxu0 0.0
  %1059 = vmatpush1.msra.mxu0 0.0
  %1060 = vmatprep.subr.mxu0 0.0
  %1061 = vmatpush1.msra.mxu0 0.0
  %1062 = vmatprep.subr.mxu0 0.0
  %1063 = vmatpush1.msra.mxu0 0.0
  %1064 = vmatprep.subr.mxu0 0.0
  %1065 = vmatpush1.msra.mxu0 0.0
  %1066 = vmatprep.subr.mxu0 0.0
  %1067 = vmatpush1.msra.mxu0 0.0
  %1068 = vmatprep.subr.mxu0 0.0
  %1069 = vmatpush1.msra.mxu0 0.0
  %1070 = vmatprep.subr.mxu0 0.0
  %1071 = vmatpush1.msra.mxu0 0.0
  %1072 = vmatprep.subr.mxu0 0.0
  %1073 = vmatpush1.msra.mxu0 0.0
  %1074 = vmatprep.subr.mxu0 0.0
  %1075 = vmatpush1.msra.mxu0 0.0
  %1076 = vmatprep.subr.mxu0 0.0
  %1077 = vmatpush1.msra.mxu0 %v347
  %1078 = vmatprep.subr.mxu0 0.0
  %1079 = vmatpush1.msra.mxu0 %v346
  %1080 = vmatprep.subr.mxu0 0.0
  %1081 = vmatpush1.msra.mxu0 %v345
  %1082 = vmatprep.subr.mxu0 0.0
  %1083 = vmatpush1.msra.mxu0 %v344
  %1084 = vmatprep.subr.mxu0 0.0
  %1085 = vmatpush2.msra.mxu0 0.0
  %1086 = vmatprep.subr.mxu0 0.0
  %1087 = vmatpush2.msra.mxu0 0.0
  %1088 = vmatprep.subr.mxu0 0.0
  %1089 = vmatpush2.msra.mxu0 0.0
  %1090 = vmatprep.subr.mxu0 0.0
  %1091 = vmatpush2.msra.mxu0 0.0
  %1092 = vmatprep.subr.mxu0 0.0
  %1093 = vmatpush2.msra.mxu0 0.0
  %1094 = vmatprep.subr.mxu0 0.0
  %1095 = vmatpush2.msra.mxu0 0.0
  %1096 = vmatprep.subr.mxu0 0.0
  %1097 = vmatpush2.msra.mxu0 0.0
  %1098 = vmatprep.subr.mxu0 0.0
  %1099 = vmatpush2.msra.mxu0 0.0
  %1100 = vmatprep.subr.mxu0 0.0
  %1101 = vmatpush2.msra.mxu0 0.0
  %1102 = vmatprep.subr.mxu0 0.0
  %1103 = vmatpush2.msra.mxu0 0.0
  %1104 = vmatprep.subr.mxu0 0.0
  %1105 = vmatpush2.msra.mxu0 0.0
  %1106 = vmatprep.subr.mxu0 0.0
  %1107 = vmatpush2.msra.mxu0 0.0
  %1108 = vmatprep.subr.mxu0 0.0
  %1109 = vmatpush2.msra.mxu0 0.0
  %1110 = vmatprep.subr.mxu0 0.0
  %1111 = vmatpush2.msra.mxu0 0.0
  %1112 = vmatprep.subr.mxu0 0.0
  %1113 = vmatpush2.msra.mxu0 0.0
  %1114 = vmatprep.subr.mxu0 0.0
  %1115 = vmatpush2.msra.mxu0 0.0
  %1116 = vmatprep.mubr.f32.mxu0 0.0
  %1117 = vmatmul.mubr.f32.gmra.mxu0 %v1050
  %v1118 = vpop.f32.mrf.mxu0
  %v1119 = vadd.f32 0.0, %v1118
  %v1120 = vpop.f32.mrf.mxu0
  %1121 = vdwg.mxu0
  %v1122 = vadd.f32 %v341, %v1119
  %v1123 = vxor.u32 %v1122, 2147483648
  %v1124 = vmul.f32 %v1123, 1.442695
  %v1125 = vpow.pop %v1124
  %v1126 = vadd.f32 %v1125, 1.0
  %v1127 = vrcp.pop %v1126
  %v1128 = vmul.f32 1.0, %v1127
  %v1129 = vtanh.pop %v1122
  %v1130 = vmul.f32 %v1128, %v1040
  %1132 = vrot.lane.b32.xlu0 %v1129, 64
  %v1133 = vpop.permute.xlu0 %1132
  %v1135 = vmul.f32 %v1128, %v1133
  %1137 = vrot.lane.b32.xlu0 %v1135, 32
  %v1138 = vpop.permute.xlu0 %1137
  %v1140 = vadd.f32 %v1130, %v1138
  %v1141 = vtanh.pop %v1140
  %1143 = vrot.lane.b32.xlu0 %v1141, 64
  %v1144 = vpop.permute.xlu0 %1143
  %v1146 = vmul.f32 %v1128, %v1144
  %v1147 = vld [vmem:[%s7] sm:$0xff]
  %v1148 = vld [vmem:[%s7 + $0x8] sm:$0xff]
  %v1149 = vld [vmem:[%s7 + $0x10] sm:$0xff]
  %v1150 = vld [vmem:[%s7 + $0x18] sm:$0xff]
  %v1151 = vld [vmem:[%s8] sm:$0x1]
  %v1153 = vlaneseq
  %v1154 = vshrl.u32 %v1153, 7
  %v1155 = vsub.s32 0, %v1154
  %v1156 = vrot.slane %v1151, %v1155
  %1159 = vrot.lane.b32.xlu0 %v1146, 32
  %v1160 = vpop.permute.xlu0 %1159
  %v1161 = vsel %vm348, %v1160, 0
  %1163 = vmatprep.subr.mxu0 0.0
  %1164 = vmatpush1.msra.mxu0 0.0
  %1165 = vmatprep.subr.mxu0 0.0
  %1166 = vmatpush1.msra.mxu0 0.0
  %1167 = vmatprep.subr.mxu0 0.0
  %1168 = vmatpush1.msra.mxu0 0.0
  %1169 = vmatprep.subr.mxu0 0.0
  %1170 = vmatpush1.msra.mxu0 0.0
  %1171 = vmatprep.subr.mxu0 0.0
  %1172 = vmatpush1.msra.mxu0 0.0
  %1173 = vmatprep.subr.mxu0 0.0
  %1174 = vmatpush1.msra.mxu0 0.0
  %1175 = vmatprep.subr.mxu0 0.0
  %1176 = vmatpush1.msra.mxu0 0.0
  %1177 = vmatprep.subr.mxu0 0.0
  %1178 = vmatpush1.msra.mxu0 0.0
  %1179 = vmatprep.subr.mxu0 0.0
  %1180 = vmatpush1.msra.mxu0 0.0
  %1181 = vmatprep.subr.mxu0 0.0
  %1182 = vmatpush1.msra.mxu0 0.0
  %1183 = vmatprep.subr.mxu0 0.0
  %1184 = vmatpush1.msra.mxu0 0.0
  %1185 = vmatprep.subr.mxu0 0.0
  %1186 = vmatpush1.msra.mxu0 0.0
  %1187 = vmatprep.subr.mxu0 0.0
  %1188 = vmatpush1.msra.mxu0 %v1150
  %1189 = vmatprep.subr.mxu0 0.0
  %1190 = vmatpush1.msra.mxu0 %v1149
  %1191 = vmatprep.subr.mxu0 0.0
  %1192 = vmatpush1.msra.mxu0 %v1148
  %1193 = vmatprep.subr.mxu0 0.0
  %1194 = vmatpush1.msra.mxu0 %v1147
  %1195 = vmatprep.subr.mxu0 0.0
  %1196 = vmatpush2.msra.mxu0 0.0
  %1197 = vmatprep.subr.mxu0 0.0
  %1198 = vmatpush2.msra.mxu0 0.0
  %1199 = vmatprep.subr.mxu0 0.0
  %1200 = vmatpush2.msra.mxu0 0.0
  %1201 = vmatprep.subr.mxu0 0.0
  %1202 = vmatpush2.msra.mxu0 0.0
  %1203 = vmatprep.subr.mxu0 0.0
  %1204 = vmatpush2.msra.mxu0 0.0
  %1205 = vmatprep.subr.mxu0 0.0
  %1206 = vmatpush2.msra.mxu0 0.0
  %1207 = vmatprep.subr.mxu0 0.0
  %1208 = vmatpush2.msra.mxu0 0.0
  %1209 = vmatprep.subr.mxu0 0.0
  %1210 = vmatpush2.msra.mxu0 0.0
  %1211 = vmatprep.subr.mxu0 0.0
  %1212 = vmatpush2.msra.mxu0 0.0
  %1213 = vmatprep.subr.mxu0 0.0
  %1214 = vmatpush2.msra.mxu0 0.0
  %1215 = vmatprep.subr.mxu0 0.0
  %1216 = vmatpush2.msra.mxu0 0.0
  %1217 = vmatprep.subr.mxu0 0.0
  %1218 = vmatpush2.msra.mxu0 0.0
  %1219 = vmatprep.subr.mxu0 0.0
  %1220 = vmatpush2.msra.mxu0 0.0
  %1221 = vmatprep.subr.mxu0 0.0
  %1222 = vmatpush2.msra.mxu0 0.0
  %1223 = vmatprep.subr.mxu0 0.0
  %1224 = vmatpush2.msra.mxu0 0.0
  %1225 = vmatprep.subr.mxu0 0.0
  %1226 = vmatpush2.msra.mxu0 0.0
  %1227 = vmatprep.mubr.f32.mxu0 0.0
  %1228 = vmatmul.mubr.f32.gmra.mxu0 %v1161
  %v1229 = vpop.f32.mrf.mxu0
  %v1230 = vadd.f32 %v1156, %v1229
  %v1231 = vpop.f32.mrf.mxu0
  %1232 = vdwg.mxu0
  %v1233 = vmax.f32 %v1230, 0.0
  %v1234 = vld [vmem:[%s11] sm:$0x1]
  %v1235 = vld [vmem:[%s1] sm:$0x1]
  %v1236 = vld [vmem:[%s10] sm:$0xff]
  %vm1237 = vcmask 64512
  %v1239 = vsel %vm1237, %v1235, 0
  %1241 = vmatprep.subr.mxu0 0.0
  %1242 = vmatpush1.msra.mxu0 0.0
  %1243 = vmatprep.subr.mxu0 0.0
  %1244 = vmatpush1.msra.mxu0 0.0
  %1245 = vmatprep.subr.mxu0 0.0
  %1246 = vmatpush1.msra.mxu0 0.0
  %1247 = vmatprep.subr.mxu0 0.0
  %1248 = vmatpush1.msra.mxu0 0.0
  %1249 = vmatprep.subr.mxu0 0.0
  %1250 = vmatpush1.msra.mxu0 0.0
  %1251 = vmatprep.subr.mxu0 0.0
  %1252 = vmatpush1.msra.mxu0 0.0
  %1253 = vmatprep.subr.mxu0 0.0
  %1254 = vmatpush1.msra.mxu0 0.0
  %1255 = vmatprep.subr.mxu0 0.0
  %1256 = vmatpush1.msra.mxu0 0.0
  %1257 = vmatprep.subr.mxu0 0.0
  %1258 = vmatpush1.msra.mxu0 0.0
  %1259 = vmatprep.subr.mxu0 0.0
  %1260 = vmatpush1.msra.mxu0 0.0
  %1261 = vmatprep.subr.mxu0 0.0
  %1262 = vmatpush1.msra.mxu0 0.0
  %1263 = vmatprep.subr.mxu0 0.0
  %1264 = vmatpush1.msra.mxu0 0.0
  %1265 = vmatprep.subr.mxu0 0.0
  %1266 = vmatpush1.msra.mxu0 0.0
  %1267 = vmatprep.subr.mxu0 0.0
  %1268 = vmatpush1.msra.mxu0 0.0
  %1269 = vmatprep.subr.mxu0 0.0
  %1270 = vmatpush1.msra.mxu0 0.0
  %1271 = vmatprep.subr.mxu0 0.0
  %1272 = vmatpush1.msra.mxu0 %v1236
  %1273 = vmatprep.subr.mxu0 0.0
  %1274 = vmatpush2.msra.mxu0 0.0
  %1275 = vmatprep.subr.mxu0 0.0
  %1276 = vmatpush2.msra.mxu0 0.0
  %1277 = vmatprep.subr.mxu0 0.0
  %1278 = vmatpush2.msra.mxu0 0.0
  %1279 = vmatprep.subr.mxu0 0.0
  %1280 = vmatpush2.msra.mxu0 0.0
  %1281 = vmatprep.subr.mxu0 0.0
  %1282 = vmatpush2.msra.mxu0 0.0
  %1283 = vmatprep.subr.mxu0 0.0
  %1284 = vmatpush2.msra.mxu0 0.0
  %1285 = vmatprep.subr.mxu0 0.0
  %1286 = vmatpush2.msra.mxu0 0.0
  %1287 = vmatprep.subr.mxu0 0.0
  %1288 = vmatpush2.msra.mxu0 0.0
  %1289 = vmatprep.subr.mxu0 0.0
  %1290 = vmatpush2.msra.mxu0 0.0
  %1291 = vmatprep.subr.mxu0 0.0
  %1292 = vmatpush2.msra.mxu0 0.0
  %1293 = vmatprep.subr.mxu0 0.0
  %1294 = vmatpush2.msra.mxu0 0.0
  %1295 = vmatprep.subr.mxu0 0.0
  %1296 = vmatpush2.msra.mxu0 0.0
  %1297 = vmatprep.subr.mxu0 0.0
  %1298 = vmatpush2.msra.mxu0 0.0
  %1299 = vmatprep.subr.mxu0 0.0
  %1300 = vmatpush2.msra.mxu0 0.0
  %1301 = vmatprep.subr.mxu0 0.0
  %1302 = vmatpush2.msra.mxu0 0.0
  %1303 = vmatprep.subr.mxu0 0.0
  %1304 = vmatpush2.msra.mxu0 0.0
  %1305 = vmatprep.mubr.f32.mxu0 0.0
  %1306 = vmatmul.mubr.f32.gmra.mxu0 %v1239
  %v1307 = vpop.f32.mrf.mxu0
  %v1308 = vadd.f32 0.0, %v1307
  %v1309 = vpop.f32.mrf.mxu0
  %1310 = vdwg.mxu0
  %v1311 = vadd.f32 %v1234, %v1308
  %v1312 = vld [vmem:[%s9] sm:$0xff]
  %v1313 = vld [vmem:[%s9 + $0x8] sm:$0xff]
  %v1314 = vld [vmem:[%s9 + $0x10] sm:$0xff]
  %v1316 = vlaneseq
  %v1317 = vshrl.u32 %v1316, 7
  %v1318 = vsub.s32 0, %v1317
  %v1319 = vrot.slane %v1311, %v1318
  %vm1321 = vcmask 195584
  %v1323 = vsel %vm1321, %v1233, 0
  %1325 = vmatprep.subr.mxu0 0.0
  %1326 = vmatpush1.msra.mxu0 0.0
  %1327 = vmatprep.subr.mxu0 0.0
  %1328 = vmatpush1.msra.mxu0 0.0
  %1329 = vmatprep.subr.mxu0 0.0
  %1330 = vmatpush1.msra.mxu0 0.0
  %1331 = vmatprep.subr.mxu0 0.0
  %1332 = vmatpush1.msra.mxu0 0.0
  %1333 = vmatprep.subr.mxu0 0.0
  %1334 = vmatpush1.msra.mxu0 0.0
  %1335 = vmatprep.subr.mxu0 0.0
  %1336 = vmatpush1.msra.mxu0 0.0
  %1337 = vmatprep.subr.mxu0 0.0
  %1338 = vmatpush1.msra.mxu0 0.0
  %1339 = vmatprep.subr.mxu0 0.0
  %1340 = vmatpush1.msra.mxu0 0.0
  %1341 = vmatprep.subr.mxu0 0.0
  %1342 = vmatpush1.msra.mxu0 0.0
  %1343 = vmatprep.subr.mxu0 0.0
  %1344 = vmatpush1.msra.mxu0 0.0
  %1345 = vmatprep.subr.mxu0 0.0
  %1346 = vmatpush1.msra.mxu0 0.0
  %1347 = vmatprep.subr.mxu0 0.0
  %1348 = vmatpush1.msra.mxu0 0.0
  %1349 = vmatprep.subr.mxu0 0.0
  %1350 = vmatpush1.msra.mxu0 0.0
  %1351 = vmatprep.subr.mxu0 0.0
  %1352 = vmatpush1.msra.mxu0 %v1314
  %1353 = vmatprep.subr.mxu0 0.0
  %1354 = vmatpush1.msra.mxu0 %v1313
  %1355 = vmatprep.subr.mxu0 0.0
  %1356 = vmatpush1.msra.mxu0 %v1312
  %1357 = vmatprep.subr.mxu0 0.0
  %1358 = vmatpush2.msra.mxu0 0.0
  %1359 = vmatprep.subr.mxu0 0.0
  %1360 = vmatpush2.msra.mxu0 0.0
  %1361 = vmatprep.subr.mxu0 0.0
  %1362 = vmatpush2.msra.mxu0 0.0
  %1363 = vmatprep.subr.mxu0 0.0
  %1364 = vmatpush2.msra.mxu0 0.0
  %1365 = vmatprep.subr.mxu0 0.0
  %1366 = vmatpush2.msra.mxu0 0.0
  %1367 = vmatprep.subr.mxu0 0.0
  %1368 = vmatpush2.msra.mxu0 0.0
  %1369 = vmatprep.subr.mxu0 0.0
  %1370 = vmatpush2.msra.mxu0 0.0
  %1371 = vmatprep.subr.mxu0 0.0
  %1372 = vmatpush2.msra.mxu0 0.0
  %1373 = vmatprep.subr.mxu0 0.0
  %1374 = vmatpush2.msra.mxu0 0.0
  %1375 = vmatprep.subr.mxu0 0.0
  %1376 = vmatpush2.msra.mxu0 0.0
  %1377 = vmatprep.subr.mxu0 0.0
  %1378 = vmatpush2.msra.mxu0 0.0
  %1379 = vmatprep.subr.mxu0 0.0
  %1380 = vmatpush2.msra.mxu0 0.0
  %1381 = vmatprep.subr.mxu0 0.0
  %1382 = vmatpush2.msra.mxu0 0.0
  %1383 = vmatprep.subr.mxu0 0.0
  %1384 = vmatpush2.msra.mxu0 0.0
  %1385 = vmatprep.subr.mxu0 0.0
  %1386 = vmatpush2.msra.mxu0 0.0
  %1387 = vmatprep.subr.mxu0 0.0
  %1388 = vmatpush2.msra.mxu0 0.0
  %1389 = vmatprep.mubr.f32.mxu0 0.0
  %1390 = vmatmul.mubr.f32.gmra.mxu0 %v1323
  %v1391 = vpop.f32.mrf.mxu0
  %v1392 = vadd.f32 %v1319, %v1391
  %v1393 = vpop.f32.mrf.mxu0
  %1394 = vdwg.mxu0
  %v1395 = vmax.f32 %v1392, 0.0
  %v1396 = vld [vmem:[%s12] sm:$0xff]
  %v1397 = vld [vmem:[%s12 + $0x8] sm:$0xff]
  %v1398 = vld [vmem:[%s12 + $0x10] sm:$0xff]
  %v1399 = vld [vmem:[%s12 + $0x18] sm:$0xff]
  %v1400 = vld [vmem:[%s13] sm:$0x1]
  %v1402 = vlaneseq
  %v1403 = vshrl.u32 %v1402, 7
  %v1404 = vsub.s32 0, %v1403
  %v1405 = vrot.slane %v1400, %v1404
  %v1408 = vsel %vm348, %v1395, 0
  %1410 = vmatprep.subr.mxu0 0.0
  %1411 = vmatpush1.msra.mxu0 0.0
  %1412 = vmatprep.subr.mxu0 0.0
  %1413 = vmatpush1.msra.mxu0 0.0
  %1414 = vmatprep.subr.mxu0 0.0
  %1415 = vmatpush1.msra.mxu0 0.0
  %1416 = vmatprep.subr.mxu0 0.0
  %1417 = vmatpush1.msra.mxu0 0.0
  %1418 = vmatprep.subr.mxu0 0.0
  %1419 = vmatpush1.msra.mxu0 0.0
  %1420 = vmatprep.subr.mxu0 0.0
  %1421 = vmatpush1.msra.mxu0 0.0
  %1422 = vmatprep.subr.mxu0 0.0
  %1423 = vmatpush1.msra.mxu0 0.0
  %1424 = vmatprep.subr.mxu0 0.0
  %1425 = vmatpush1.msra.mxu0 0.0
  %1426 = vmatprep.subr.mxu0 0.0
  %1427 = vmatpush1.msra.mxu0 0.0
  %1428 = vmatprep.subr.mxu0 0.0
  %1429 = vmatpush1.msra.mxu0 0.0
  %1430 = vmatprep.subr.mxu0 0.0
  %1431 = vmatpush1.msra.mxu0 0.0
  %1432 = vmatprep.subr.mxu0 0.0
  %1433 = vmatpush1.msra.mxu0 0.0
  %1434 = vmatprep.subr.mxu0 0.0
  %1435 = vmatpush1.msra.mxu0 %v1399
  %1436 = vmatprep.subr.mxu0 0.0
  %1437 = vmatpush1.msra.mxu0 %v1398
  %1438 = vmatprep.subr.mxu0 0.0
  %1439 = vmatpush1.msra.mxu0 %v1397
  %1440 = vmatprep.subr.mxu0 0.0
  %1441 = vmatpush1.msra.mxu0 %v1396
  %1442 = vmatprep.subr.mxu0 0.0
  %1443 = vmatpush2.msra.mxu0 0.0
  %1444 = vmatprep.subr.mxu0 0.0
  %1445 = vmatpush2.msra.mxu0 0.0
  %1446 = vmatprep.subr.mxu0 0.0
  %1447 = vmatpush2.msra.mxu0 0.0
  %1448 = vmatprep.subr.mxu0 0.0
  %1449 = vmatpush2.msra.mxu0 0.0
  %1450 = vmatprep.subr.mxu0 0.0
  %1451 = vmatpush2.msra.mxu0 0.0
  %1452 = vmatprep.subr.mxu0 0.0
  %1453 = vmatpush2.msra.mxu0 0.0
  %1454 = vmatprep.subr.mxu0 0.0
  %1455 = vmatpush2.msra.mxu0 0.0
  %1456 = vmatprep.subr.mxu0 0.0
  %1457 = vmatpush2.msra.mxu0 0.0
  %1458 = vmatprep.subr.mxu0 0.0
  %1459 = vmatpush2.msra.mxu0 0.0
  %1460 = vmatprep.subr.mxu0 0.0
  %1461 = vmatpush2.msra.mxu0 0.0
  %1462 = vmatprep.subr.mxu0 0.0
  %1463 = vmatpush2.msra.mxu0 0.0
  %1464 = vmatprep.subr.mxu0 0.0
  %1465 = vmatpush2.msra.mxu0 0.0
  %1466 = vmatprep.subr.mxu0 0.0
  %1467 = vmatpush2.msra.mxu0 0.0
  %1468 = vmatprep.subr.mxu0 0.0
  %1469 = vmatpush2.msra.mxu0 0.0
  %1470 = vmatprep.subr.mxu0 0.0
  %1471 = vmatpush2.msra.mxu0 0.0
  %1472 = vmatprep.subr.mxu0 0.0
  %1473 = vmatpush2.msra.mxu0 0.0
  %1474 = vmatprep.mubr.f32.mxu0 0.0
  %1475 = vmatmul.mubr.f32.gmra.mxu0 %v1408
  %v1476 = vpop.f32.mrf.mxu0
  %v1477 = vadd.f32 %v1405, %v1476
  %v1478 = vpop.f32.mrf.mxu0
  %1479 = vdwg.mxu0
  %1480 = vst.msk [vmem:[%s14] sm:$0xff] %vm1321, %v1477
  // Predicated region
  $region58: #{generator_forward.1} parent=0 // pred_check
    _
  $region59: #{generator_forward.1} parent=0 // pred_check_branch
    %1482 = sbr.rel (0) target = $region61
  $region60: #{generator_forward.1} parent=0 // pred_region
    _
  $region61: #{generator_forward.1} parent=0 // pred_fallthru
    _
  // Predicated region
  $region62: #{generator_forward.1} parent=0 // pred_check
    _
  $region63: #{generator_forward.1} parent=0 // pred_check_branch
    %1484 = sbr.rel (0) target = $region65
  $region64: #{generator_forward.1} parent=0 // pred_region
    _
  $region65: #{generator_forward.1} parent=0 // pred_fallthru
    _

</llo_original>
